<compile_context>
chip_gen: v7x
topology: tpu7x:2x2x1
jax: 0.10.0
libtpu: 0.0.40
codegen_flags: <defaults>
</compile_context>

<pallas_src>
import functools

import jax
import jax.numpy as jnp
from jax.experimental import pallas as pl
from jax.experimental.pallas import tpu as pltpu

# TUM noise model constants (compute_sigma, dataset='TUM')
FOCAL = 525.0
BASELINE = 1.2
SIGMA_DISP = 0.4
SIGMA_XY = 5.5


# ----------------------------------------------------------------------------
# Pallas kernel 1: surface normals from a vertex map (compute_normal)
# ----------------------------------------------------------------------------
def _normal_kernel(vp_ref, n_ref):
    # vp_ref: (1, 3, H+2, W+2) replicate-padded vertex map;  n_ref: (1, 3, H, W)
    H = n_ref.shape[2]
    W = n_ref.shape[3]
    v = vp_ref[0]
    tl = v[:, 0:H, 0:W]
    tc = v[:, 0:H, 1:W + 1]
    tr = v[:, 0:H, 2:W + 2]
    ml = v[:, 1:H + 1, 0:W]
    mr = v[:, 1:H + 1, 2:W + 2]
    bl = v[:, 2:H + 2, 0:W]
    bc = v[:, 2:H + 2, 1:W + 1]
    br = v[:, 2:H + 2, 2:W + 2]
    dx = -tl + tr - 2.0 * ml + 2.0 * mr - bl + br      # Sobel x, unnormalized (3,H,W)
    dy = -tl - 2.0 * tc - tr + bl + 2.0 * bc + br      # Sobel y
    # normal = dx x dy per pixel, then n / (|n| + 1e-8)
    nx = dx[1] * dy[2] - dx[2] * dy[1]
    ny = dx[2] * dy[0] - dx[0] * dy[2]
    nz = dx[0] * dy[1] - dx[1] * dy[0]
    mag = jnp.sqrt(nx * nx + ny * ny + nz * nz)
    inv = 1.0 / (mag + 1e-8)
    n_ref[0, 0] = nx * inv
    n_ref[0, 1] = ny * inv
    n_ref[0, 2] = nz * inv


def compute_normal_pallas(vertex):
    """compute_normal(vertex_map): (B,3,H,W) -> (B,3,H,W); invalid depth -> 0."""
    B, _, H, W = vertex.shape
    # TODO(synk): replicate padding kept as a jnp.pad pre-pass; an in-kernel
    #             pltpu.roll + edge-mask variant would avoid this extra HBM copy.
    vp = jnp.pad(vertex, ((0, 0), (0, 0), (1, 1), (1, 1)), mode="edge")
    normal = pl.pallas_call(
        _normal_kernel,
        out_shape=jax.ShapeDtypeStruct((B, 3, H, W), vertex.dtype),
        grid=(B,),
        in_specs=[pl.BlockSpec((1, 3, H + 2, W + 2), lambda b: (b, 0, 0, 0))],
        out_specs=pl.BlockSpec((1, 3, H, W), lambda b: (b, 0, 0, 0)),
        compiler_params=pltpu.CompilerParams(dimension_semantics=("parallel",)),
    )(vp)
    depth = vertex[:, 2:3]
    invalid = (depth == depth.min()) | (depth == depth.max())
    return jnp.where(invalid, 0.0, normal)


# ----------------------------------------------------------------------------
# Pallas kernel 2: fused residual / sigma / Jacobian / JtJ / Jtr
# ----------------------------------------------------------------------------
def _icp_kernel(v0_ref, v0t_ref, rv1_ref, rn1_ref, view_ref, R_ref,
                jtj_ref, jtr_ref, jbuf_ref):
    b = pl.program_id(0)
    nt = pl.program_id(1)

    v0 = v0_ref[0]                       # (3, TN)  template vertices
    diff = v0t_ref[0] - rv1_ref[0]       # (3, TN)  T*v0 - warped v1
    rn = rn1_ref[0]                      # (3, TN)  warped normals
    inview = view_ref[0]                 # (1, TN)

    n1, n2, n3 = rn[0:1], rn[1:2], rn[2:3]
    dx, dy, dz = diff[0:1], diff[1:2], diff[2:3]
    v01, v02, v03 = v0[0:1], v0[1:2], v0[2:3]

    # a = n^T R (== R^T n), with R read from SMEM (flattened row-major (B, 9)).
    a1 = n1 * R_ref[b, 0] + n2 * R_ref[b, 3] + n3 * R_ref[b, 6]
    a2 = n1 * R_ref[b, 1] + n2 * R_ref[b, 4] + n3 * R_ref[b, 7]
    a3 = n1 * R_ref[b, 2] + n2 * R_ref[b, 5] + n3 * R_ref[b, 8]

    # point-to-plane residual and occlusion test (folded into the kernel)
    res = n1 * dx + n2 * dy + n3 * dz                     # (1, TN)
    dist2 = dx * dx + dy * dy + dz * dz
    occ = (inview < 0.5) | (dist2 > 0.01)                 # ||diff|| > 0.1

    # TUM sigma model: cov = sum_i (n^T R)_i^2 * sigma_depth_i^2
    sxy = v03 * (SIGMA_XY / FOCAL)
    sz = (v03 * v03) * (SIGMA_DISP / (FOCAL * BASELINE))
    cov = (a1 * a1 + a2 * a2) * (sxy * sxy) + (a3 * a3) * (sz * sz)
    inv_sig = jax.lax.rsqrt(cov + 1e-8)                   # EUP; folds the +1e-8 guard

    w_res = jnp.where(occ, 1e-6, res * inv_sig)           # w_res[occ] = 1e-6

    # J_F_p = -[ n^T R [v0]_x , -n^T R ] / sigma  (sign folded into the scale).
    nscale = -inv_sig
    jbuf_ref[0:1, :] = (a2 * v03 - a3 * v02) * nscale
    jbuf_ref[1:2, :] = (a3 * v01 - a1 * v03) * nscale
    jbuf_ref[2:3, :] = (a1 * v02 - a2 * v01) * nscale
    jbuf_ref[3:4, :] = a1 * inv_sig
    jbuf_ref[4:5, :] = a2 * inv_sig
    jbuf_ref[5:6, :] = a3 * inv_sig

    J = jbuf_ref[...]                                     # (6, TN)
    dn = (((1,), (1,)), ((), ()))                         # contract the pixel (lane) dim
    jtj = jax.lax.dot_general(J, J, dn, preferred_element_type=jnp.float32)   # (6, 6)
    jtr = jnp.sum(J * w_res, axis=1, keepdims=True)                            # (6, 1)

    @pl.when(nt == 0)
    def _():
        jtj_ref[...] = jnp.zeros_like(jtj_ref)
        jtr_ref[...] = jnp.zeros_like(jtr_ref)

    jtj_ref[0] += jtj
    jtr_ref[0] += jtr


def _choose_tile_n(N, max_tn=65536):
    if N <= max_tn:
        return N
    for tn in range(max_tn - max_tn % 128, 0, -128):
        if N % tn == 0:
            return tn
    return N


def icp_normal_eq_pallas(v0, v0t, rv1, rn1, inview, rot):
    """Fused residual/Jacobian/normal-equation kernel: returns JtJ (B,6,6), Jtr (B,6,1)."""
    B, _, N = v0.shape
    TN = _choose_tile_n(N)
    NT = N // TN
    vec3_spec = pl.BlockSpec((1, 3, TN), lambda b, n: (b, 0, n))
    vec1_spec = pl.BlockSpec((1, 1, TN), lambda b, n: (b, 0, n))
    jtj, jtr = pl.pallas_call(
        _icp_kernel,
        out_shape=(jax.ShapeDtypeStruct((B, 6, 6), jnp.float32),
                   jax.ShapeDtypeStruct((B, 6, 1), jnp.float32)),
        grid=(B, NT),
        in_specs=[vec3_spec, vec3_spec, vec3_spec, vec3_spec, vec1_spec,
                  pl.BlockSpec(memory_space=pltpu.MemorySpace.SMEM)],
        out_specs=(pl.BlockSpec((1, 6, 6), lambda b, n: (b, 0, 0)),
                   pl.BlockSpec((1, 6, 1), lambda b, n: (b, 0, 0))),
        scratch_shapes=[pltpu.VMEM((6, TN), jnp.float32)],
        compiler_params=pltpu.CompilerParams(
            dimension_semantics=("parallel", "arbitrary"),
            vmem_limit_bytes=48 * 1024 * 1024),
    )(v0, v0t, rv1, rn1, inview, rot.reshape(B, 9))
    return jtj, jtr


# ----------------------------------------------------------------------------
# JAX glue: bilinear warp, SO(3) exp map, damped GN solve / pose update
# ----------------------------------------------------------------------------
def warp_features(img, u, v):
    """Border-clamped bilinear sampling. img: (B,C,H,W); u,v: (B,N) -> (B,C,N)."""
    # TODO(synk): data-dependent gather kept in plain JAX (no rectangular BlockSpec form).
    B, C, H, W = img.shape
    u = jnp.clip(u, 0.0, W - 1.0)
    v = jnp.clip(v, 0.0, H - 1.0)
    u0f = jnp.floor(u)
    v0f = jnp.floor(v)
    du = (u - u0f)[:, None, :]
    dv = (v - v0f)[:, None, :]
    u0 = u0f.astype(jnp.int32)
    v0 = v0f.astype(jnp.int32)
    u1 = jnp.minimum(u0 + 1, W - 1)
    v1 = jnp.minimum(v0 + 1, H - 1)
    imgf = img.reshape(B, C, H * W)

    def gather(vi, ui):
        idx = jnp.broadcast_to((vi * W + ui)[:, None, :], imgf.shape)
        return jnp.take_along_axis(imgf, idx, axis=2)

    p00 = gather(v0, u0)
    p01 = gather(v0, u1)
    p10 = gather(v1, u0)
    p11 = gather(v1, u1)
    return (p00 * (1 - du) * (1 - dv) + p01 * du * (1 - dv)
            + p10 * (1 - du) * dv + p11 * du * dv)


def _skew(w):  # (B,3) -> (B,3,3)
    z = jnp.zeros_like(w[:, 0])
    return jnp.stack([
        jnp.stack([z, -w[:, 2], w[:, 1]], axis=-1),
        jnp.stack([w[:, 2], z, -w[:, 0]], axis=-1),
        jnp.stack([-w[:, 1], w[:, 0], z], axis=-1)], axis=-2)


def _twist2mat(w):  # Rodrigues / geometry.batch_twist2Mat
    theta = jnp.sqrt(jnp.sum(w * w, axis=-1, keepdims=True) + 1e-24)[..., None]  # (B,1,1)
    Wx = _skew(w)
    A = jnp.sin(theta) / theta
    Bc = (1.0 - jnp.cos(theta)) / (theta * theta)
    eye = jnp.eye(3, dtype=w.dtype)[None]
    return eye + A * Wx + Bc * jnp.einsum("bij,bjk->bik", Wx, Wx)


def gn_update(JtJ, JtR, rot, trs):
    """lev_mar_H + inverse_update_pose (inverse compositional update)."""
    eye6 = jnp.eye(6, dtype=JtJ.dtype)
    trace = jnp.sum(JtJ * eye6[None], axis=(1, 2))
    Hess = JtJ + (trace * 1e-6)[:, None, None] * eye6[None]
    xi = jnp.linalg.solve(Hess, JtR)                        # (B,6,1), [rot(3); trs(3)]
    dR = _twist2mat(-xi[:, 0:3, 0])
    dt = -jnp.einsum("bij,bjk->bik", dR, xi[:, 3:6])
    # TODO(synk): assumes geometry.batch_Rt_compose(R, t, dR, dt) = (R@dR, R@dt + t).
    rot_new = jnp.einsum("bij,bjk->bik", rot, dR)
    trs_new = jnp.einsum("bij,bjk->bik", rot, dt) + trs
    return rot_new, trs_new


# ----------------------------------------------------------------------------
# Inverse_ICP.forward
# ----------------------------------------------------------------------------
@functools.partial(jax.jit, static_argnames=("max_iter",))
def inverse_icp_forward(pose10, depth0, depth1, K, max_iter=3):
    rot, trs = pose10
    B, _, H, W = depth0.shape
    N = H * W
    f32 = jnp.float32

    fx = K[:, 0].reshape(B, 1, 1)
    fy = K[:, 1].reshape(B, 1, 1)
    cx = K[:, 2].reshape(B, 1, 1)
    cy = K[:, 3].reshape(B, 1, 1)
    u_g, v_g = jnp.meshgrid(jnp.arange(W, dtype=f32), jnp.arange(H, dtype=f32),
                            indexing="xy")
    px = (u_g[None] - cx) / fx                            # (B,H,W)
    py = (v_g[None] - cy) / fy
    d0 = depth0[:, 0]
    d1 = depth1[:, 0]
    vertex0 = jnp.stack([px * d0, py * d0, d0], axis=1)   # (B,3,H,W)
    vertex1 = jnp.stack([px * d1, py * d1, d1], axis=1)

    # TODO(synk): the PyTorch module also computes compute_normal(vertex0), but it only
    #             feeds the dead `normal_diff` term; skipped (output is identical).
    normal1 = compute_normal_pallas(vertex1)

    v0_flat = vertex0.reshape(B, 3, N)
    vn1 = jnp.concatenate([vertex1, normal1], axis=1)     # (B,6,H,W): one gather set

    fxn = K[:, 0][:, None]
    fyn = K[:, 1][:, None]
    cxn = K[:, 2][:, None]
    cyn = K[:, 3][:, None]

    for _ in range(max_iter):
        v0t = jnp.einsum("bij,bjn->bin", rot, v0_flat) + trs          # (B,3,N)
        s_ = v0t[:, 2]
        s_safe = jnp.where(jnp.abs(s_) < 1e-8, 1e-8, s_)
        u_ = v0t[:, 0] / s_safe * fxn + cxn                           # (B,N)
        v_ = v0t[:, 1] / s_safe * fyn + cyn
        inview = ((u_ > 0) & (u_ < W - 1) & (v_ > 0) & (v_ < H - 1)).astype(f32)

        warped = warp_features(vn1, u_, v_)                           # (B,6,N)
        rv1 = warped[:, 0:3]
        rn1 = warped[:, 3:6]

        JtJ, JtR = icp_normal_eq_pallas(v0_flat, v0t, rv1, rn1,
                                        inview[:, None, :], rot)
        rot, trs = gn_update(JtJ, JtR, rot, trs)

    weights = jnp.ones((B, 1, H, W), depth0.dtype)
    return (rot, trs), weights


# ----------------------------------------------------------------------------
if __name__ == "__main__":
    key = jax.random.PRNGKey(0)
    ks = jax.random.split(key, 3)
    B, H, W = 2, 16, 16

    depth0 = 1.0 + 2.0 * jax.random.uniform(ks[0], (B, 1, H, W), jnp.float32)
    depth1 = 1.0 + 2.0 * jax.random.uniform(ks[1], (B, 1, H, W), jnp.float32)
    K = jnp.tile(jnp.array([[20.0, 20.0, 8.0, 8.0]], jnp.float32), (B, 1))
    rot0 = jnp.tile(jnp.eye(3, dtype=jnp.float32)[None], (B, 1, 1))
    trs0 = 0.01 * jax.random.normal(ks[2], (B, 3, 1), jnp.float32)

    (rot_out, trs_out), weights = inverse_icp_forward(
        (rot0, trs0), depth0, depth1, K, max_iter=3)
    jax.block_until_ready((rot_out, trs_out, weights))

    assert rot_out.shape == (B, 3, 3) and trs_out.shape == (B, 3, 1)
    assert weights.shape == (B, 1, H, W)
    assert bool(jnp.all(jnp.isfinite(rot_out)))
    assert bool(jnp.all(jnp.isfinite(trs_out)))
    assert bool(jnp.all(jnp.isfinite(weights)))
    print("KERNEL_OK")
</pallas_src>

<mosaic_0001>
module attributes {stable_mosaic.version = 11 : i64} {
  func.func private @main(%arg0: i32) attributes {dimension_semantics = [#tpu.dimension_semantics<core_parallel>], iteration_bounds = array<i64: 2>, tpu.core_type = #tpu.core_type<sc_scalar_subcore>, window_params = []} {
    return
  }
}

module attributes {stable_mosaic.version = 11 : i64} {
  func.func private @main(%arg0: i32) attributes {dimension_semantics = [#tpu.dimension_semantics<core_parallel>], iteration_bounds = array<i64: 2>, tpu.core_type = #tpu.core_type<sc_scalar_subcore>, window_params = []} {
    return
  }
}

module attributes {stable_mosaic.version = 11 : i64} {
  func.func @_normal_kernel(%arg0: i32, %arg1: memref<1x3x18x18xf32, #tpu.memory_space<vmem>>, %arg2: memref<1x3x16x16xf32, #tpu.memory_space<vmem>>) attributes {dimension_semantics = [#tpu.dimension_semantics<parallel>], iteration_bounds = array<i64: 2>, scalar_prefetch = 0 : i64, scratch_operands = 0 : i64, tpu.core_type = #tpu.core_type<tc>, window_params = [{transform_indices = @transform_0, window_bounds = array<i64: 1, 3, 18, 18>}, {transform_indices = @transform_1, window_bounds = array<i64: 1, 3, 16, 16>}]} {
    %c0 = arith.constant 0 : index
    %c0_0 = arith.constant 0 : index
    %c0_1 = arith.constant 0 : index
    %c0_2 = arith.constant 0 : index
    %0 = vector.load %arg1[%c0, %c0_0, %c0_1, %c0_2] : memref<1x3x18x18xf32, #tpu.memory_space<vmem>>, vector<1x3x18x18xf32>
    %1 = vector.shape_cast %0 : vector<1x3x18x18xf32> to vector<3x18x18xf32>
    %2 = vector.extract_strided_slice %1 {offsets = [0, 0, 0], sizes = [3, 16, 16], strides = [1, 1, 1]} : vector<3x18x18xf32> to vector<3x16x16xf32>
    %3 = vector.extract_strided_slice %1 {offsets = [0, 0, 1], sizes = [3, 16, 16], strides = [1, 1, 1]} : vector<3x18x18xf32> to vector<3x16x16xf32>
    %4 = vector.extract_strided_slice %1 {offsets = [0, 0, 2], sizes = [3, 16, 16], strides = [1, 1, 1]} : vector<3x18x18xf32> to vector<3x16x16xf32>
    %5 = vector.extract_strided_slice %1 {offsets = [0, 1, 0], sizes = [3, 16, 16], strides = [1, 1, 1]} : vector<3x18x18xf32> to vector<3x16x16xf32>
    %6 = vector.extract_strided_slice %1 {offsets = [0, 1, 2], sizes = [3, 16, 16], strides = [1, 1, 1]} : vector<3x18x18xf32> to vector<3x16x16xf32>
    %7 = vector.extract_strided_slice %1 {offsets = [0, 2, 0], sizes = [3, 16, 16], strides = [1, 1, 1]} : vector<3x18x18xf32> to vector<3x16x16xf32>
    %8 = vector.extract_strided_slice %1 {offsets = [0, 2, 1], sizes = [3, 16, 16], strides = [1, 1, 1]} : vector<3x18x18xf32> to vector<3x16x16xf32>
    %9 = vector.extract_strided_slice %1 {offsets = [0, 2, 2], sizes = [3, 16, 16], strides = [1, 1, 1]} : vector<3x18x18xf32> to vector<3x16x16xf32>
    %cst = arith.constant 0.000000e+00 : f32
    %10 = vector.broadcast %cst : f32 to vector<3x16x16xf32>
    %11 = arith.subf %10, %2 : vector<3x16x16xf32>
    %12 = arith.addf %11, %4 : vector<3x16x16xf32>
    %cst_3 = arith.constant 2.000000e+00 : f32
    %13 = vector.broadcast %cst_3 : f32 to vector<3x16x16xf32>
    %14 = arith.mulf %13, %5 : vector<3x16x16xf32>
    %15 = arith.subf %12, %14 : vector<3x16x16xf32>
    %cst_4 = arith.constant 2.000000e+00 : f32
    %16 = vector.broadcast %cst_4 : f32 to vector<3x16x16xf32>
    %17 = arith.mulf %16, %6 : vector<3x16x16xf32>
    %18 = arith.addf %15, %17 : vector<3x16x16xf32>
    %19 = arith.subf %18, %7 : vector<3x16x16xf32>
    %20 = arith.addf %19, %9 : vector<3x16x16xf32>
    %cst_5 = arith.constant 0.000000e+00 : f32
    %21 = vector.broadcast %cst_5 : f32 to vector<3x16x16xf32>
    %22 = arith.subf %21, %2 : vector<3x16x16xf32>
    %cst_6 = arith.constant 2.000000e+00 : f32
    %23 = vector.broadcast %cst_6 : f32 to vector<3x16x16xf32>
    %24 = arith.mulf %23, %3 : vector<3x16x16xf32>
    %25 = arith.subf %22, %24 : vector<3x16x16xf32>
    %26 = arith.subf %25, %4 : vector<3x16x16xf32>
    %27 = arith.addf %26, %7 : vector<3x16x16xf32>
    %cst_7 = arith.constant 2.000000e+00 : f32
    %28 = vector.broadcast %cst_7 : f32 to vector<3x16x16xf32>
    %29 = arith.mulf %28, %8 : vector<3x16x16xf32>
    %30 = arith.addf %27, %29 : vector<3x16x16xf32>
    %31 = arith.addf %30, %9 : vector<3x16x16xf32>
    %32 = vector.extract_strided_slice %20 {offsets = [1, 0, 0], sizes = [1, 16, 16], strides = [1, 1, 1]} : vector<3x16x16xf32> to vector<1x16x16xf32>
    %33 = vector.shape_cast %32 : vector<1x16x16xf32> to vector<16x16xf32>
    %34 = vector.extract_strided_slice %31 {offsets = [2, 0, 0], sizes = [1, 16, 16], strides = [1, 1, 1]} : vector<3x16x16xf32> to vector<1x16x16xf32>
    %35 = vector.shape_cast %34 : vector<1x16x16xf32> to vector<16x16xf32>
    %36 = arith.mulf %33, %35 : vector<16x16xf32>
    %37 = vector.extract_strided_slice %20 {offsets = [2, 0, 0], sizes = [1, 16, 16], strides = [1, 1, 1]} : vector<3x16x16xf32> to vector<1x16x16xf32>
    %38 = vector.shape_cast %37 : vector<1x16x16xf32> to vector<16x16xf32>
    %39 = vector.extract_strided_slice %31 {offsets = [1, 0, 0], sizes = [1, 16, 16], strides = [1, 1, 1]} : vector<3x16x16xf32> to vector<1x16x16xf32>
    %40 = vector.shape_cast %39 : vector<1x16x16xf32> to vector<16x16xf32>
    %41 = arith.mulf %38, %40 : vector<16x16xf32>
    %42 = arith.subf %36, %41 : vector<16x16xf32>
    %43 = vector.extract_strided_slice %20 {offsets = [2, 0, 0], sizes = [1, 16, 16], strides = [1, 1, 1]} : vector<3x16x16xf32> to vector<1x16x16xf32>
    %44 = vector.shape_cast %43 : vector<1x16x16xf32> to vector<16x16xf32>
    %45 = vector.extract_strided_slice %31 {offsets = [0, 0, 0], sizes = [1, 16, 16], strides = [1, 1, 1]} : vector<3x16x16xf32> to vector<1x16x16xf32>
    %46 = vector.shape_cast %45 : vector<1x16x16xf32> to vector<16x16xf32>
    %47 = arith.mulf %44, %46 : vector<16x16xf32>
    %48 = vector.extract_strided_slice %20 {offsets = [0, 0, 0], sizes = [1, 16, 16], strides = [1, 1, 1]} : vector<3x16x16xf32> to vector<1x16x16xf32>
    %49 = vector.shape_cast %48 : vector<1x16x16xf32> to vector<16x16xf32>
    %50 = vector.extract_strided_slice %31 {offsets = [2, 0, 0], sizes = [1, 16, 16], strides = [1, 1, 1]} : vector<3x16x16xf32> to vector<1x16x16xf32>
    %51 = vector.shape_cast %50 : vector<1x16x16xf32> to vector<16x16xf32>
    %52 = arith.mulf %49, %51 : vector<16x16xf32>
    %53 = arith.subf %47, %52 : vector<16x16xf32>
    %54 = vector.extract_strided_slice %20 {offsets = [0, 0, 0], sizes = [1, 16, 16], strides = [1, 1, 1]} : vector<3x16x16xf32> to vector<1x16x16xf32>
    %55 = vector.shape_cast %54 : vector<1x16x16xf32> to vector<16x16xf32>
    %56 = vector.extract_strided_slice %31 {offsets = [1, 0, 0], sizes = [1, 16, 16], strides = [1, 1, 1]} : vector<3x16x16xf32> to vector<1x16x16xf32>
    %57 = vector.shape_cast %56 : vector<1x16x16xf32> to vector<16x16xf32>
    %58 = arith.mulf %55, %57 : vector<16x16xf32>
    %59 = vector.extract_strided_slice %20 {offsets = [1, 0, 0], sizes = [1, 16, 16], strides = [1, 1, 1]} : vector<3x16x16xf32> to vector<1x16x16xf32>
    %60 = vector.shape_cast %59 : vector<1x16x16xf32> to vector<16x16xf32>
    %61 = vector.extract_strided_slice %31 {offsets = [0, 0, 0], sizes = [1, 16, 16], strides = [1, 1, 1]} : vector<3x16x16xf32> to vector<1x16x16xf32>
    %62 = vector.shape_cast %61 : vector<1x16x16xf32> to vector<16x16xf32>
    %63 = arith.mulf %60, %62 : vector<16x16xf32>
    %64 = arith.subf %58, %63 : vector<16x16xf32>
    %65 = arith.mulf %42, %42 : vector<16x16xf32>
    %66 = arith.mulf %53, %53 : vector<16x16xf32>
    %67 = arith.addf %65, %66 : vector<16x16xf32>
    %68 = arith.mulf %64, %64 : vector<16x16xf32>
    %69 = arith.addf %67, %68 : vector<16x16xf32>
    %70 = math.sqrt %69 : vector<16x16xf32>
    %cst_8 = arith.constant 9.99999993E-9 : f32
    %71 = vector.broadcast %cst_8 : f32 to vector<16x16xf32>
    %72 = arith.addf %70, %71 : vector<16x16xf32>
    %cst_9 = arith.constant 1.000000e+00 : f32
    %73 = vector.broadcast %cst_9 : f32 to vector<16x16xf32>
    %74 = arith.divf %73, %72 : vector<16x16xf32>
    %75 = arith.mulf %42, %74 : vector<16x16xf32>
    %c0_10 = arith.constant 0 : index
    %c0_11 = arith.constant 0 : index
    %c0_12 = arith.constant 0 : index
    %c0_13 = arith.constant 0 : index
    %76 = vector.load %arg2[%c0_10, %c0_11, %c0_12, %c0_13] : memref<1x3x16x16xf32, #tpu.memory_space<vmem>>, vector<1x1x16x16xf32>
    %77 = vector.shape_cast %76 : vector<1x1x16x16xf32> to vector<16x16xf32>
    %78 = vector.shape_cast %75 : vector<16x16xf32> to vector<1x1x16x16xf32>
    tpu.vector_store %arg2[%c0_10, %c0_11, %c0_12, %c0_13], %78 {strides = array<i32>} : memref<1x3x16x16xf32, #tpu.memory_space<vmem>>, vector<1x1x16x16xf32>,
    %79 = arith.mulf %53, %74 : vector<16x16xf32>
    %c0_14 = arith.constant 0 : index
    %c1 = arith.constant 1 : index
    %c0_15 = arith.constant 0 : index
    %c0_16 = arith.constant 0 : index
    %80 = vector.load %arg2[%c0_14, %c1, %c0_15, %c0_16] : memref<1x3x16x16xf32, #tpu.memory_space<vmem>>, vector<1x1x16x16xf32>
    %81 = vector.shape_cast %80 : vector<1x1x16x16xf32> to vector<16x16xf32>
    %82 = vector.shape_cast %79 : vector<16x16xf32> to vector<1x1x16x16xf32>
    tpu.vector_store %arg2[%c0_14, %c1, %c0_15, %c0_16], %82 {strides = array<i32>} : memref<1x3x16x16xf32, #tpu.memory_space<vmem>>, vector<1x1x16x16xf32>,
    %83 = arith.mulf %64, %74 : vector<16x16xf32>
    %c0_17 = arith.constant 0 : index
    %c2 = arith.constant 2 : index
    %c0_18 = arith.constant 0 : index
    %c0_19 = arith.constant 0 : index
    %84 = vector.load %arg2[%c0_17, %c2, %c0_18, %c0_19] : memref<1x3x16x16xf32, #tpu.memory_space<vmem>>, vector<1x1x16x16xf32>
    %85 = vector.shape_cast %84 : vector<1x1x16x16xf32> to vector<16x16xf32>
    %86 = vector.shape_cast %83 : vector<16x16xf32> to vector<1x1x16x16xf32>
    tpu.vector_store %arg2[%c0_17, %c2, %c0_18, %c0_19], %86 {strides = array<i32>} : memref<1x3x16x16xf32, #tpu.memory_space<vmem>>, vector<1x1x16x16xf32>,
    return
  }
  func.func @transform_0(%arg0: i32) -> (i32, i32, i32, i32) {
    %c0_i32 = arith.constant 0 : i32
    %c0_i32_0 = arith.constant 0 : i32
    %c0_i32_1 = arith.constant 0 : i32
    %c0_i32_2 = arith.constant 0 : i32
    return %arg0, %c0_i32, %c0_i32_0, %c0_i32_1 : i32, i32, i32, i32
  }
  func.func @transform_1(%arg0: i32) -> (i32, i32, i32, i32) {
    %c0_i32 = arith.constant 0 : i32
    %c0_i32_0 = arith.constant 0 : i32
    %c0_i32_1 = arith.constant 0 : i32
    %c0_i32_2 = arith.constant 0 : i32
    return %arg0, %c0_i32, %c0_i32_0, %c0_i32_1 : i32, i32, i32, i32
  }
}

module attributes {stable_mosaic.version = 11 : i64} {
  func.func @_icp_kernel(%arg0: i32, %arg1: i32, %arg2: memref<1x3x256xf32, #tpu.memory_space<vmem>>, %arg3: memref<1x3x256xf32, #tpu.memory_space<vmem>>, %arg4: memref<1x3x256xf32, #tpu.memory_space<vmem>>, %arg5: memref<1x3x256xf32, #tpu.memory_space<vmem>>, %arg6: memref<1x1x256xf32, #tpu.memory_space<vmem>>, %arg7: memref<2x9xf32, #tpu.memory_space<smem>>, %arg8: memref<1x6x6xf32, #tpu.memory_space<vmem>>, %arg9: memref<1x6x1xf32, #tpu.memory_space<vmem>>, %arg10: memref<6x256xf32, #tpu.memory_space<vmem>>) attributes {dimension_semantics = [#tpu.dimension_semantics<parallel>, #tpu.dimension_semantics<arbitrary>], iteration_bounds = array<i64: 2, 1>, scalar_prefetch = 0 : i64, scratch_operands = 1 : i64, tpu.core_type = #tpu.core_type<tc>, window_params = [{transform_indices = @transform_0, window_bounds = array<i64: 1, 3, 256>}, {transform_indices = @transform_1, window_bounds = array<i64: 1, 3, 256>}, {transform_indices = @transform_2, window_bounds = array<i64: 1, 3, 256>}, {transform_indices = @transform_3, window_bounds = array<i64: 1, 3, 256>}, {transform_indices = @transform_4, window_bounds = array<i64: 1, 1, 256>}, {transform_indices = @transform_5, window_bounds = array<i64: 2, 9>}, {transform_indices = @transform_6, window_bounds = array<i64: 1, 6, 6>}, {transform_indices = @transform_7, window_bounds = array<i64: 1, 6, 1>}]} {
    %c0 = arith.constant 0 : index
    %c0_0 = arith.constant 0 : index
    %c0_1 = arith.constant 0 : index
    %0 = vector.load %arg2[%c0, %c0_0, %c0_1] : memref<1x3x256xf32, #tpu.memory_space<vmem>>, vector<1x3x256xf32>
    %1 = vector.shape_cast %0 : vector<1x3x256xf32> to vector<3x256xf32>
    %c0_2 = arith.constant 0 : index
    %c0_3 = arith.constant 0 : index
    %c0_4 = arith.constant 0 : index
    %2 = vector.load %arg3[%c0_2, %c0_3, %c0_4] : memref<1x3x256xf32, #tpu.memory_space<vmem>>, vector<1x3x256xf32>
    %3 = vector.shape_cast %2 : vector<1x3x256xf32> to vector<3x256xf32>
    %c0_5 = arith.constant 0 : index
    %c0_6 = arith.constant 0 : index
    %c0_7 = arith.constant 0 : index
    %4 = vector.load %arg4[%c0_5, %c0_6, %c0_7] : memref<1x3x256xf32, #tpu.memory_space<vmem>>, vector<1x3x256xf32>
    %5 = vector.shape_cast %4 : vector<1x3x256xf32> to vector<3x256xf32>
    %6 = arith.subf %3, %5 : vector<3x256xf32>
    %c0_8 = arith.constant 0 : index
    %c0_9 = arith.constant 0 : index
    %c0_10 = arith.constant 0 : index
    %7 = vector.load %arg5[%c0_8, %c0_9, %c0_10] : memref<1x3x256xf32, #tpu.memory_space<vmem>>, vector<1x3x256xf32>
    %8 = vector.shape_cast %7 : vector<1x3x256xf32> to vector<3x256xf32>
    %c0_11 = arith.constant 0 : index
    %c0_12 = arith.constant 0 : index
    %c0_13 = arith.constant 0 : index
    %9 = vector.load %arg6[%c0_11, %c0_12, %c0_13] : memref<1x1x256xf32, #tpu.memory_space<vmem>>, vector<1x1x256xf32>
    %10 = vector.shape_cast %9 : vector<1x1x256xf32> to vector<1x256xf32>
    %11 = vector.extract_strided_slice %8 {offsets = [0, 0], sizes = [1, 256], strides = [1, 1]} : vector<3x256xf32> to vector<1x256xf32>
    %12 = vector.extract_strided_slice %8 {offsets = [1, 0], sizes = [1, 256], strides = [1, 1]} : vector<3x256xf32> to vector<1x256xf32>
    %13 = vector.extract_strided_slice %8 {offsets = [2, 0], sizes = [1, 256], strides = [1, 1]} : vector<3x256xf32> to vector<1x256xf32>
    %14 = vector.extract_strided_slice %6 {offsets = [0, 0], sizes = [1, 256], strides = [1, 1]} : vector<3x256xf32> to vector<1x256xf32>
    %15 = vector.extract_strided_slice %6 {offsets = [1, 0], sizes = [1, 256], strides = [1, 1]} : vector<3x256xf32> to vector<1x256xf32>
    %16 = vector.extract_strided_slice %6 {offsets = [2, 0], sizes = [1, 256], strides = [1, 1]} : vector<3x256xf32> to vector<1x256xf32>
    %17 = vector.extract_strided_slice %1 {offsets = [0, 0], sizes = [1, 256], strides = [1, 1]} : vector<3x256xf32> to vector<1x256xf32>
    %18 = vector.extract_strided_slice %1 {offsets = [1, 0], sizes = [1, 256], strides = [1, 1]} : vector<3x256xf32> to vector<1x256xf32>
    %19 = vector.extract_strided_slice %1 {offsets = [2, 0], sizes = [1, 256], strides = [1, 1]} : vector<3x256xf32> to vector<1x256xf32>
    %20 = arith.index_cast %arg0 : i32 to index
    %c0_14 = arith.constant 0 : index
    %21 = memref.load %arg7[%20, %c0_14] : memref<2x9xf32, #tpu.memory_space<smem>>
    %22 = vector.broadcast %21 : f32 to vector<1x256xf32>
    %23 = arith.mulf %11, %22 : vector<1x256xf32>
    %24 = arith.index_cast %arg0 : i32 to index
    %c3 = arith.constant 3 : index
    %25 = memref.load %arg7[%24, %c3] : memref<2x9xf32, #tpu.memory_space<smem>>
    %26 = vector.broadcast %25 : f32 to vector<1x256xf32>
    %27 = arith.mulf %12, %26 : vector<1x256xf32>
    %28 = arith.addf %23, %27 : vector<1x256xf32>
    %29 = arith.index_cast %arg0 : i32 to index
    %c6 = arith.constant 6 : index
    %30 = memref.load %arg7[%29, %c6] : memref<2x9xf32, #tpu.memory_space<smem>>
    %31 = vector.broadcast %30 : f32 to vector<1x256xf32>
    %32 = arith.mulf %13, %31 : vector<1x256xf32>
    %33 = arith.addf %28, %32 : vector<1x256xf32>
    %34 = arith.index_cast %arg0 : i32 to index
    %c1 = arith.constant 1 : index
    %35 = memref.load %arg7[%34, %c1] : memref<2x9xf32, #tpu.memory_space<smem>>
    %36 = vector.broadcast %35 : f32 to vector<1x256xf32>
    %37 = arith.mulf %11, %36 : vector<1x256xf32>
    %38 = arith.index_cast %arg0 : i32 to index
    %c4 = arith.constant 4 : index
    %39 = memref.load %arg7[%38, %c4] : memref<2x9xf32, #tpu.memory_space<smem>>
    %40 = vector.broadcast %39 : f32 to vector<1x256xf32>
    %41 = arith.mulf %12, %40 : vector<1x256xf32>
    %42 = arith.addf %37, %41 : vector<1x256xf32>
    %43 = arith.index_cast %arg0 : i32 to index
    %c7 = arith.constant 7 : index
    %44 = memref.load %arg7[%43, %c7] : memref<2x9xf32, #tpu.memory_space<smem>>
    %45 = vector.broadcast %44 : f32 to vector<1x256xf32>
    %46 = arith.mulf %13, %45 : vector<1x256xf32>
    %47 = arith.addf %42, %46 : vector<1x256xf32>
    %48 = arith.index_cast %arg0 : i32 to index
    %c2 = arith.constant 2 : index
    %49 = memref.load %arg7[%48, %c2] : memref<2x9xf32, #tpu.memory_space<smem>>
    %50 = vector.broadcast %49 : f32 to vector<1x256xf32>
    %51 = arith.mulf %11, %50 : vector<1x256xf32>
    %52 = arith.index_cast %arg0 : i32 to index
    %c5 = arith.constant 5 : index
    %53 = memref.load %arg7[%52, %c5] : memref<2x9xf32, #tpu.memory_space<smem>>
    %54 = vector.broadcast %53 : f32 to vector<1x256xf32>
    %55 = arith.mulf %12, %54 : vector<1x256xf32>
    %56 = arith.addf %51, %55 : vector<1x256xf32>
    %57 = arith.index_cast %arg0 : i32 to index
    %c8 = arith.constant 8 : index
    %58 = memref.load %arg7[%57, %c8] : memref<2x9xf32, #tpu.memory_space<smem>>
    %59 = vector.broadcast %58 : f32 to vector<1x256xf32>
    %60 = arith.mulf %13, %59 : vector<1x256xf32>
    %61 = arith.addf %56, %60 : vector<1x256xf32>
    %62 = arith.mulf %11, %14 : vector<1x256xf32>
    %63 = arith.mulf %12, %15 : vector<1x256xf32>
    %64 = arith.addf %62, %63 : vector<1x256xf32>
    %65 = arith.mulf %13, %16 : vector<1x256xf32>
    %66 = arith.addf %64, %65 : vector<1x256xf32>
    %67 = arith.mulf %14, %14 : vector<1x256xf32>
    %68 = arith.mulf %15, %15 : vector<1x256xf32>
    %69 = arith.addf %67, %68 : vector<1x256xf32>
    %70 = arith.mulf %16, %16 : vector<1x256xf32>
    %71 = arith.addf %69, %70 : vector<1x256xf32>
    %cst = arith.constant 5.000000e-01 : f32
    %72 = vector.broadcast %cst : f32 to vector<1x256xf32>
    %73 = arith.cmpf olt, %10, %72 : vector<1x256xf32>
    %cst_15 = arith.constant 0.00999999977 : f32
    %74 = vector.broadcast %cst_15 : f32 to vector<1x256xf32>
    %75 = arith.cmpf ogt, %71, %74 : vector<1x256xf32>
    %76 = arith.ori %73, %75 : vector<1x256xi1>
    %cst_16 = arith.constant 0.0104761906 : f32
    %77 = vector.broadcast %cst_16 : f32 to vector<1x256xf32>
    %78 = arith.mulf %19, %77 : vector<1x256xf32>
    %79 = arith.mulf %19, %19 : vector<1x256xf32>
    %cst_17 = arith.constant 6.34920609E-4 : f32
    %80 = vector.broadcast %cst_17 : f32 to vector<1x256xf32>
    %81 = arith.mulf %79, %80 : vector<1x256xf32>
    %82 = arith.mulf %33, %33 : vector<1x256xf32>
    %83 = arith.mulf %47, %47 : vector<1x256xf32>
    %84 = arith.addf %82, %83 : vector<1x256xf32>
    %85 = arith.mulf %78, %78 : vector<1x256xf32>
    %86 = arith.mulf %84, %85 : vector<1x256xf32>
    %87 = arith.mulf %61, %61 : vector<1x256xf32>
    %88 = arith.mulf %81, %81 : vector<1x256xf32>
    %89 = arith.mulf %87, %88 : vector<1x256xf32>
    %90 = arith.addf %86, %89 : vector<1x256xf32>
    %cst_18 = arith.constant 9.99999993E-9 : f32
    %91 = vector.broadcast %cst_18 : f32 to vector<1x256xf32>
    %92 = arith.addf %90, %91 : vector<1x256xf32>
    %93 = math.rsqrt %92 : vector<1x256xf32>
    %94 = arith.mulf %66, %93 : vector<1x256xf32>
    %cst_19 = arith.constant 9.99999997E-7 : f32
    %95 = vector.broadcast %cst_19 : f32 to vector<1x256xf32>
    %96 = arith.select %76, %95, %94 : vector<1x256xi1>, vector<1x256xf32>
    %cst_20 = arith.constant 0.000000e+00 : f32
    %97 = vector.broadcast %cst_20 : f32 to vector<1x256xf32>
    %98 = arith.subf %97, %93 : vector<1x256xf32>
    %99 = arith.mulf %47, %19 : vector<1x256xf32>
    %100 = arith.mulf %61, %18 : vector<1x256xf32>
    %101 = arith.subf %99, %100 : vector<1x256xf32>
    %102 = arith.mulf %101, %98 : vector<1x256xf32>
    %c0_21 = arith.constant 0 : index
    %c0_22 = arith.constant 0 : index
    %103 = vector.load %arg10[%c0_21, %c0_22] : memref<6x256xf32, #tpu.memory_space<vmem>>, vector<1x256xf32>
    tpu.vector_store %arg10[%c0_21, %c0_22], %102 {strides = array<i32>} : memref<6x256xf32, #tpu.memory_space<vmem>>, vector<1x256xf32>,
    %104 = arith.mulf %61, %17 : vector<1x256xf32>
    %105 = arith.mulf %33, %19 : vector<1x256xf32>
    %106 = arith.subf %104, %105 : vector<1x256xf32>
    %107 = arith.mulf %106, %98 : vector<1x256xf32>
    %c1_23 = arith.constant 1 : index
    %c0_24 = arith.constant 0 : index
    %108 = vector.load %arg10[%c1_23, %c0_24] : memref<6x256xf32, #tpu.memory_space<vmem>>, vector<1x256xf32>
    tpu.vector_store %arg10[%c1_23, %c0_24], %107 {strides = array<i32>} : memref<6x256xf32, #tpu.memory_space<vmem>>, vector<1x256xf32>,
    %109 = arith.mulf %33, %18 : vector<1x256xf32>
    %110 = arith.mulf %47, %17 : vector<1x256xf32>
    %111 = arith.subf %109, %110 : vector<1x256xf32>
    %112 = arith.mulf %111, %98 : vector<1x256xf32>
    %c2_25 = arith.constant 2 : index
    %c0_26 = arith.constant 0 : index
    %113 = vector.load %arg10[%c2_25, %c0_26] : memref<6x256xf32, #tpu.memory_space<vmem>>, vector<1x256xf32>
    tpu.vector_store %arg10[%c2_25, %c0_26], %112 {strides = array<i32>} : memref<6x256xf32, #tpu.memory_space<vmem>>, vector<1x256xf32>,
    %114 = arith.mulf %33, %93 : vector<1x256xf32>
    %c3_27 = arith.constant 3 : index
    %c0_28 = arith.constant 0 : index
    %115 = vector.load %arg10[%c3_27, %c0_28] : memref<6x256xf32, #tpu.memory_space<vmem>>, vector<1x256xf32>
    tpu.vector_store %arg10[%c3_27, %c0_28], %114 {strides = array<i32>} : memref<6x256xf32, #tpu.memory_space<vmem>>, vector<1x256xf32>,
    %116 = arith.mulf %47, %93 : vector<1x256xf32>
    %c4_29 = arith.constant 4 : index
    %c0_30 = arith.constant 0 : index
    %117 = vector.load %arg10[%c4_29, %c0_30] : memref<6x256xf32, #tpu.memory_space<vmem>>, vector<1x256xf32>
    tpu.vector_store %arg10[%c4_29, %c0_30], %116 {strides = array<i32>} : memref<6x256xf32, #tpu.memory_space<vmem>>, vector<1x256xf32>,
    %118 = arith.mulf %61, %93 : vector<1x256xf32>
    %c5_31 = arith.constant 5 : index
    %c0_32 = arith.constant 0 : index
    %119 = vector.load %arg10[%c5_31, %c0_32] : memref<6x256xf32, #tpu.memory_space<vmem>>, vector<1x256xf32>
    tpu.vector_store %arg10[%c5_31, %c0_32], %118 {strides = array<i32>} : memref<6x256xf32, #tpu.memory_space<vmem>>, vector<1x256xf32>,
    %c0_33 = arith.constant 0 : index
    %c0_34 = arith.constant 0 : index
    %120 = vector.load %arg10[%c0_33, %c0_34] : memref<6x256xf32, #tpu.memory_space<vmem>>, vector<6x256xf32>
    %cst_35 = arith.constant dense<0.000000e+00> : vector<6x6xf32>
    %121 = tpu.matmul %120, %120, %cst_35 {dimension_numbers = #tpu.dot_dimension_numbers<[1], [1], [0], [0], [0, 0, 1, 0], [], []>} : vector<6x256xf32>, vector<6x256xf32>, vector<6x6xf32> -> vector<6x6xf32>
    %122 = vector.broadcast %96 : vector<1x256xf32> to vector<6x256xf32>
    %123 = arith.mulf %120, %122 : vector<6x256xf32>
    %cst_36 = arith.constant dense<0.000000e+00> : vector<6xf32>
    %124 = vector.multi_reduction <add>, %123, %cst_36 [1] : vector<6x256xf32> to vector<6xf32>
    %125 = vector.shape_cast %124 : vector<6xf32> to vector<6x1xf32>
    %c0_i32 = arith.constant 0 : i32
    %126 = arith.cmpi eq, %arg1, %c0_i32 : i32
    %127 = arith.extui %126 : i1 to i32
    %c0_i32_37 = arith.constant 0 : i32
    %128 = arith.cmpi ne, %127, %c0_i32_37 : i32
    scf.if %128 {
      %cst_50 = arith.constant 0.000000e+00 : f32
      %141 = vector.broadcast %cst_50 : f32 to vector<1x6x6xf32>
      %c0_51 = arith.constant 0 : index
      %c0_52 = arith.constant 0 : index
      %c0_53 = arith.constant 0 : index
      %142 = vector.load %arg8[%c0_51, %c0_52, %c0_53] : memref<1x6x6xf32, #tpu.memory_space<vmem>>, vector<1x6x6xf32>
      tpu.vector_store %arg8[%c0_51, %c0_52, %c0_53], %141 {strides = array<i32>} : memref<1x6x6xf32, #tpu.memory_space<vmem>>, vector<1x6x6xf32>,
      %cst_54 = arith.constant 0.000000e+00 : f32
      %143 = vector.broadcast %cst_54 : f32 to vector<1x6x1xf32>
      %c0_55 = arith.constant 0 : index
      %c0_56 = arith.constant 0 : index
      %c0_57 = arith.constant 0 : index
      %144 = vector.load %arg9[%c0_55, %c0_56, %c0_57] : memref<1x6x1xf32, #tpu.memory_space<vmem>>, vector<1x6x1xf32>
      tpu.vector_store %arg9[%c0_55, %c0_56, %c0_57], %143 {strides = array<i32>} : memref<1x6x1xf32, #tpu.memory_space<vmem>>, vector<1x6x1xf32>,
    } else {
    }
    %c0_38 = arith.constant 0 : index
    %c0_39 = arith.constant 0 : index
    %c0_40 = arith.constant 0 : index
    %129 = vector.load %arg8[%c0_38, %c0_39, %c0_40] : memref<1x6x6xf32, #tpu.memory_space<vmem>>, vector<1x6x6xf32>
    %130 = vector.shape_cast %129 : vector<1x6x6xf32> to vector<6x6xf32>
    %131 = arith.addf %130, %121 : vector<6x6xf32>
    %c0_41 = arith.constant 0 : index
    %c0_42 = arith.constant 0 : index
    %c0_43 = arith.constant 0 : index
    %132 = vector.load %arg8[%c0_41, %c0_42, %c0_43] : memref<1x6x6xf32, #tpu.memory_space<vmem>>, vector<1x6x6xf32>
    %133 = vector.shape_cast %132 : vector<1x6x6xf32> to vector<6x6xf32>
    %134 = vector.shape_cast %131 : vector<6x6xf32> to vector<1x6x6xf32>
    tpu.vector_store %arg8[%c0_41, %c0_42, %c0_43], %134 {strides = array<i32>} : memref<1x6x6xf32, #tpu.memory_space<vmem>>, vector<1x6x6xf32>,
    %c0_44 = arith.constant 0 : index
    %c0_45 = arith.constant 0 : index
    %c0_46 = arith.constant 0 : index
    %135 = vector.load %arg9[%c0_44, %c0_45, %c0_46] : memref<1x6x1xf32, #tpu.memory_space<vmem>>, vector<1x6x1xf32>
    %136 = vector.shape_cast %135 : vector<1x6x1xf32> to vector<6x1xf32>
    %137 = arith.addf %136, %125 : vector<6x1xf32>
    %c0_47 = arith.constant 0 : index
    %c0_48 = arith.constant 0 : index
    %c0_49 = arith.constant 0 : index
    %138 = vector.load %arg9[%c0_47, %c0_48, %c0_49] : memref<1x6x1xf32, #tpu.memory_space<vmem>>, vector<1x6x1xf32>
    %139 = vector.shape_cast %138 : vector<1x6x1xf32> to vector<6x1xf32>
    %140 = vector.shape_cast %137 : vector<6x1xf32> to vector<1x6x1xf32>
    tpu.vector_store %arg9[%c0_47, %c0_48, %c0_49], %140 {strides = array<i32>} : memref<1x6x1xf32, #tpu.memory_space<vmem>>, vector<1x6x1xf32>,
    return
  }
  func.func @transform_0(%arg0: i32, %arg1: i32) -> (i32, i32, i32) {
    %c0_i32 = arith.constant 0 : i32
    %c0_i32_0 = arith.constant 0 : i32
    return %arg0, %c0_i32, %arg1 : i32, i32, i32
  }
  func.func @transform_1(%arg0: i32, %arg1: i32) -> (i32, i32, i32) {
    %c0_i32 = arith.constant 0 : i32
    %c0_i32_0 = arith.constant 0 : i32
    return %arg0, %c0_i32, %arg1 : i32, i32, i32
  }
  func.func @transform_2(%arg0: i32, %arg1: i32) -> (i32, i32, i32) {
    %c0_i32 = arith.constant 0 : i32
    %c0_i32_0 = arith.constant 0 : i32
    return %arg0, %c0_i32, %arg1 : i32, i32, i32
  }
  func.func @transform_3(%arg0: i32, %arg1: i32) -> (i32, i32, i32) {
    %c0_i32 = arith.constant 0 : i32
    %c0_i32_0 = arith.constant 0 : i32
    return %arg0, %c0_i32, %arg1 : i32, i32, i32
  }
  func.func @transform_4(%arg0: i32, %arg1: i32) -> (i32, i32, i32) {
    %c0_i32 = arith.constant 0 : i32
    %c0_i32_0 = arith.constant 0 : i32
    return %arg0, %c0_i32, %arg1 : i32, i32, i32
  }
  func.func @transform_5(%arg0: i32, %arg1: i32) -> (i32, i32) {
    %c0_i32 = arith.constant 0 : i32
    %c0_i32_0 = arith.constant 0 : i32
    %c0_i32_1 = arith.constant 0 : i32
    return %c0_i32, %c0_i32_0 : i32, i32
  }
  func.func @transform_6(%arg0: i32, %arg1: i32) -> (i32, i32, i32) {
    %c0_i32 = arith.constant 0 : i32
    %c0_i32_0 = arith.constant 0 : i32
    %c0_i32_1 = arith.constant 0 : i32
    return %arg0, %c0_i32, %c0_i32_0 : i32, i32, i32
  }
  func.func @transform_7(%arg0: i32, %arg1: i32) -> (i32, i32, i32) {
    %c0_i32 = arith.constant 0 : i32
    %c0_i32_0 = arith.constant 0 : i32
    %c0_i32_1 = arith.constant 0 : i32
    return %arg0, %c0_i32, %c0_i32_0 : i32, i32, i32
  }
}

</mosaic_0001>

<llo_original>
// kernel: inverse_icp_forward.4
$region0: #{inverse_icp_forward.4}
  #allocation0 [shape = 'u32[]', space=smem, size = 0x4, offset = 0x4, fixed_abs, tag = 'smem constant byte address 0x4 - core index']
  #allocation1 [shape = 'u32[144,128]{1,0:T(1,128)}', space=vmem, size = 0x12000, scoped, tag = 'internal scratch']
  %s0 = inlined_call_operand.vmem [shape: f32[2,3,18,18], index: 0, kind: input, shape index: {}]
  %s1 = inlined_call_operand.vmem [shape: f32[2,3,16,16], index: 1, kind: output, shape index: {}]
  %s2 = sld [smem:[#allocation0]]
  $region37: #{inverse_icp_forward.4} parent=0
    _
  %s4 = ssub.s32 1, %s2
  %s5 = scalar_select 0, %s4, %s2
  loop: start=0, step=1, limit=4
  $region2: #{inverse_icp_forward.4} parent=0 // loop_pre_header
    _
  $region3: #{inverse_icp_forward.4} parent=0 // loop_header
    %s7 = sphi 0, %s11
    %p8 = scmp.ge.s32.totalorder %s7, 4
    %s17 = sphi 0, %s19
    %s20 = sphi 0, %s17
    %s21 = sphi 0, %s20
    %s37 = sphi 0, %s21
    %s43 = sphi 0, %s45
    %s46 = sphi 0, %s43
    %s47 = sphi 0, %s46
    %s63 = sphi 0, %s47
  $region4: #{inverse_icp_forward.4} parent=0 // loop_header_branch
    %10 = sbr.rel (%p8) target = $region8
  $region5: #{inverse_icp_forward.4} parent=0 // loop_body
    %s12 = ssub.s32 %s7, 1
    %s13 = ssub.s32 %s7, 2
    %s14 = sadd.s32 %s7, 1
    %s15 = ssub.s32 %s7, %s14
    %p16 = scmp.eq.s32.totalorder %s15, 0
    %s18 = sadd.s32 %s17, 1
    %s19 = scalar_select %p16, %s17, %s18
    %p22 = pneg %p16
    %p23 = scmp.eq.s32.totalorder %s7, 1
    %p24 = por %p22, %p23
    %p25 = scmp.ne.s32.totalorder %s17, %s20
    %p26 = scmp.eq.s32.totalorder %s7, 0
    %p27 = por %p25, %p26
    %p28 = scmp.ne.s32.totalorder %s17, %s20
    %p29 = scmp.eq.s32.totalorder %s12, 1
    %p30 = por %p28, %p29
    %p31 = scmp.ne.s32.totalorder %s20, %s21
    %p32 = scmp.eq.s32.totalorder %s12, 0
    %p33 = por %p31, %p32
    %p34 = scmp.ne.s32.totalorder %s20, %s21
    %p35 = scmp.eq.s32.totalorder %s13, 1
    %p36 = por %p34, %p35
    %p38 = scmp.ne.s32.totalorder %s21, %s37
    %p39 = scmp.eq.s32.totalorder %s13, 0
    %p40 = por %p38, %p39
    %s41 = ssub.s32 %s7, %s14
    %p42 = scmp.eq.s32.totalorder %s41, 0
    %s44 = sadd.s32 %s43, 1
    %s45 = scalar_select %p42, %s43, %s44
    %p48 = pneg %p42
    %p49 = scmp.eq.s32.totalorder %s7, 1
    %p50 = por %p48, %p49
    %p51 = scmp.ne.s32.totalorder %s43, %s46
    %p52 = scmp.eq.s32.totalorder %s7, 0
    %p53 = por %p51, %p52
    %p54 = scmp.ne.s32.totalorder %s43, %s46
    %p55 = scmp.eq.s32.totalorder %s12, 1
    %p56 = por %p54, %p55
    %p57 = scmp.ne.s32.totalorder %s46, %s47
    %p58 = scmp.eq.s32.totalorder %s12, 0
    %p59 = por %p57, %p58
    %p60 = scmp.ne.s32.totalorder %s46, %s47
    %p61 = scmp.eq.s32.totalorder %s13, 1
    %p62 = por %p60, %p61
    %p64 = scmp.ne.s32.totalorder %s47, %s63
    %p65 = scmp.eq.s32.totalorder %s13, 0
    %p66 = por %p64, %p65
    %p67 = scmp.le.s32.totalorder 1, %s7
    %p68 = scmp.lt.s32.totalorder %s7, 3
    %p69 = pnand %p67, %p68
    %p70 = pneg %p69
    // Predicated region
    $region9: #{inverse_icp_forward.4} parent=5 // pred_check
      _
    $region10: #{inverse_icp_forward.4} parent=5 // pred_check_branch
      %72 = sbr.rel (%p69) target = $region12
    $region11: #{inverse_icp_forward.4} parent=5 // pred_region
      %s73 = ssub.s32 %s7, 1
    $region12: #{inverse_icp_forward.4} parent=5 // pred_fallthru
      _
    %p74 = scmp.lt.s32.totalorder %s7, 2
    // Predicated region
    $region13: #{inverse_icp_forward.4} parent=5 // pred_check
      %p75 = pneg %p74
    $region14: #{inverse_icp_forward.4} parent=5 // pred_check_branch
      %77 = sbr.rel (%p75) target = $region16
    $region15: #{inverse_icp_forward.4} parent=5 // pred_region
      // Predicated region
      $region17: #{inverse_icp_forward.4} parent=15 // pred_check
        %p78 = pneg %p27
      $region18: #{inverse_icp_forward.4} parent=15 // pred_check_branch
        %80 = sbr.rel (%p78) target = $region20
      $region19: #{inverse_icp_forward.4} parent=15 // pred_region
        %p81 = scmp.lt.s32.totalorder %s7, 1
        %s82 = scalar_select %p81, %s7, 1
        %s83 = smul.addr %s82, 9
        %s84 = smul.addr %s83, 8
        %s85 = scalar_lea.vmem %s0, %s84
      $region20: #{inverse_icp_forward.4} parent=15 // pred_fallthru
        _
    $region16: #{inverse_icp_forward.4} parent=5 // pred_fallthru
      _
    %p86 = scmp.le.s32.totalorder 1, %s7
    %p87 = scmp.lt.s32.totalorder %s7, 3
    %p88 = pnand %p86, %p87
    %p89 = pneg %p88
    // Predicated region
    $region21: #{inverse_icp_forward.4} parent=5 // pred_check
      _
    $region22: #{inverse_icp_forward.4} parent=5 // pred_check_branch
      %91 = sbr.rel (%p88) target = $region24
    $region23: #{inverse_icp_forward.4} parent=5 // pred_region
      %s92 = ssub.s32 %s7, 1
      %p93 = scmp.lt.s32.totalorder %s12, 1
      %s94 = scalar_select %p93, %s12, 1
      %s95 = smul.addr %s94, 9
      %s96 = smul.addr %s95, 8
      %s97 = scalar_lea.vmem %s0, %s96
      %p98 = pneg %p33
      %p99 = pneg %p30
      %p100 = pneg %p59
      %p101 = pneg %p56
      %p102 = scmp.lt.s32.totalorder %s12, 1
      %s103 = scalar_select %p102, %s12, 1
      %s104 = smul.addr %s103, 6
      %s105 = smul.addr %s104, 8
      %s106 = scalar_lea.vmem %s1, %s105
      %p107 = scmp.lt.s32.totalorder %s12, 1
      %s108 = scalar_select %p107, %s12, 1
      %s109 = smul.addr %s108, 9
      %s110 = smul.addr %s109, 8
      %s111 = scalar_lea.vmem %s0, %s110
      %p112 = scmp.lt.s32.totalorder %s12, 1
      %s113 = scalar_select %p112, %s12, 1
      %s114 = smul.addr %s113, 6
      %s115 = smul.addr %s114, 8
      %s116 = scalar_lea.vmem %s1, %s115
      %v117 = vld [vmem:[%s111] sm:$0xff]
      %v118 = vld [vmem:[%s111 + $0x8] sm:$0xff]
      %v119 = vld [vmem:[%s111 + $0x10] sm:$0x3]
      %v120 = vld [vmem:[%s111 + $0x18] sm:$0xff]
      %v121 = vld [vmem:[%s111 + $0x20] sm:$0xff]
      %v122 = vld [vmem:[%s111 + $0x28] sm:$0x3]
      %v123 = vld [vmem:[%s111 + $0x30] sm:$0xff]
      %v124 = vld [vmem:[%s111 + $0x38] sm:$0xff]
      %v125 = vld [vmem:[%s111 + $0x40] sm:$0x3]
      %v126 = vsub.f32 0.0, %v117
      %v127 = vsub.f32 0.0, %v118
      %v128 = vsub.f32 0.0, %v120
      %v129 = vsub.f32 0.0, %v121
      %v130 = vsub.f32 0.0, %v123
      %v131 = vsub.f32 0.0, %v124
      %138 = vrot.lane.b32.xlu0 %v117, 126
      %v139 = vpop.permute.xlu0 %138
      %140 = vrot.lane.b32.xlu0 %v118, 126
      %v141 = vpop.permute.xlu0 %140
      %142 = vrot.lane.b32.xlu0 %v120, 126
      %v143 = vpop.permute.xlu0 %142
      %144 = vrot.lane.b32.xlu0 %v121, 126
      %v145 = vpop.permute.xlu0 %144
      %146 = vrot.lane.b32.xlu0 %v123, 126
      %v147 = vpop.permute.xlu0 %146
      %148 = vrot.lane.b32.xlu0 %v124, 126
      %v149 = vpop.permute.xlu0 %148
      %v156 = vadd.f32 %v126, %v139
      %v157 = vadd.f32 %v127, %v141
      %v158 = vadd.f32 %v128, %v143
      %v159 = vadd.f32 %v129, %v145
      %v160 = vadd.f32 %v130, %v147
      %v161 = vadd.f32 %v131, %v149
      %v162 = vmul.f32 %v117, 2.0
      %v163 = vmul.f32 %v118, 2.0
      %v164 = vmul.f32 %v119, 2.0
      %v165 = vmul.f32 %v120, 2.0
      %v166 = vmul.f32 %v121, 2.0
      %v167 = vmul.f32 %v122, 2.0
      %v168 = vmul.f32 %v123, 2.0
      %v169 = vmul.f32 %v124, 2.0
      %v170 = vmul.f32 %v125, 2.0
      %vm180 = vcmask 1046528
      %v181 = vrot.slane %v162, 1
      %v182 = vrot.slane %v163, 1
      %v183 = vsel %vm180, %v181, %v182
      %v184 = vrot.slane %v164, 1
      %v185 = vsel %vm180, %v182, %v184
      %v186 = vrot.slane %v165, 1
      %v187 = vrot.slane %v166, 1
      %v188 = vsel %vm180, %v186, %v187
      %v189 = vrot.slane %v167, 1
      %v190 = vsel %vm180, %v187, %v189
      %v191 = vrot.slane %v168, 1
      %v192 = vrot.slane %v169, 1
      %v193 = vsel %vm180, %v191, %v192
      %v194 = vrot.slane %v170, 1
      %v195 = vsel %vm180, %v192, %v194
      %v202 = vsub.f32 %v156, %v183
      %v203 = vsub.f32 %v157, %v185
      %v204 = vsub.f32 %v158, %v188
      %v205 = vsub.f32 %v159, %v190
      %v206 = vsub.f32 %v160, %v193
      %v207 = vsub.f32 %v161, %v195
      %208 = vrot.lane.b32.xlu0 %v183, 126
      %v209 = vpop.permute.xlu0 %208
      %210 = vrot.lane.b32.xlu0 %v185, 126
      %v211 = vpop.permute.xlu0 %210
      %212 = vrot.lane.b32.xlu0 %v188, 126
      %v213 = vpop.permute.xlu0 %212
      %214 = vrot.lane.b32.xlu0 %v190, 126
      %v215 = vpop.permute.xlu0 %214
      %216 = vrot.lane.b32.xlu0 %v193, 126
      %v217 = vpop.permute.xlu0 %216
      %218 = vrot.lane.b32.xlu0 %v195, 126
      %v219 = vpop.permute.xlu0 %218
      %v226 = vadd.f32 %v202, %v209
      %v227 = vadd.f32 %v203, %v211
      %v228 = vadd.f32 %v204, %v213
      %v229 = vadd.f32 %v205, %v215
      %v230 = vadd.f32 %v206, %v217
      %v231 = vadd.f32 %v207, %v219
      %vm235 = vcmask 1045504
      %v236 = vrot.slane %v117, 2
      %v237 = vrot.slane %v118, 2
      %v238 = vsel %vm235, %v236, %v237
      %v239 = vrot.slane %v119, 2
      %v240 = vsel %vm235, %v237, %v239
      %v241 = vrot.slane %v120, 2
      %v242 = vrot.slane %v121, 2
      %v243 = vsel %vm235, %v241, %v242
      %v244 = vrot.slane %v122, 2
      %v245 = vsel %vm235, %v242, %v244
      %v246 = vrot.slane %v123, 2
      %v247 = vrot.slane %v124, 2
      %v248 = vsel %vm235, %v246, %v247
      %v249 = vrot.slane %v125, 2
      %v250 = vsel %vm235, %v247, %v249
      %v257 = vsub.f32 %v226, %v238
      %v258 = vsub.f32 %v227, %v240
      %v259 = vsub.f32 %v228, %v243
      %v260 = vsub.f32 %v229, %v245
      %v261 = vsub.f32 %v230, %v248
      %v262 = vsub.f32 %v231, %v250
      %263 = vrot.lane.b32.xlu0 %v238, 126
      %v264 = vpop.permute.xlu0 %263
      %265 = vrot.lane.b32.xlu0 %v240, 126
      %v266 = vpop.permute.xlu0 %265
      %267 = vrot.lane.b32.xlu0 %v243, 126
      %v268 = vpop.permute.xlu0 %267
      %269 = vrot.lane.b32.xlu0 %v245, 126
      %v270 = vpop.permute.xlu0 %269
      %271 = vrot.lane.b32.xlu0 %v248, 126
      %v272 = vpop.permute.xlu0 %271
      %273 = vrot.lane.b32.xlu0 %v250, 126
      %v274 = vpop.permute.xlu0 %273
      %v281 = vadd.f32 %v257, %v264
      %v282 = vadd.f32 %v258, %v266
      %v283 = vadd.f32 %v259, %v268
      %v284 = vadd.f32 %v260, %v270
      %v285 = vadd.f32 %v261, %v272
      %v286 = vadd.f32 %v262, %v274
      %287 = vrot.lane.b32.xlu0 %v162, 127
      %v288 = vpop.permute.xlu0 %287
      %289 = vrot.lane.b32.xlu0 %v163, 127
      %v290 = vpop.permute.xlu0 %289
      %291 = vrot.lane.b32.xlu0 %v165, 127
      %v292 = vpop.permute.xlu0 %291
      %293 = vrot.lane.b32.xlu0 %v166, 127
      %v294 = vpop.permute.xlu0 %293
      %295 = vrot.lane.b32.xlu0 %v168, 127
      %v296 = vpop.permute.xlu0 %295
      %297 = vrot.lane.b32.xlu0 %v169, 127
      %v298 = vpop.permute.xlu0 %297
      %v305 = vsub.f32 %v126, %v288
      %v306 = vsub.f32 %v127, %v290
      %v307 = vsub.f32 %v128, %v292
      %v308 = vsub.f32 %v129, %v294
      %v309 = vsub.f32 %v130, %v296
      %v310 = vsub.f32 %v131, %v298
      %v311 = vsub.f32 %v305, %v139
      %v312 = vsub.f32 %v306, %v141
      %v313 = vsub.f32 %v307, %v143
      %v314 = vsub.f32 %v308, %v145
      %v315 = vsub.f32 %v309, %v147
      %v316 = vsub.f32 %v310, %v149
      %v317 = vadd.f32 %v311, %v238
      %v318 = vadd.f32 %v312, %v240
      %v319 = vadd.f32 %v313, %v243
      %v320 = vadd.f32 %v314, %v245
      %v321 = vadd.f32 %v315, %v248
      %v322 = vadd.f32 %v316, %v250
      %v323 = vrot.slane %v162, 2
      %v324 = vrot.slane %v163, 2
      %v325 = vsel %vm235, %v323, %v324
      %v326 = vrot.slane %v164, 2
      %v327 = vsel %vm235, %v324, %v326
      %v328 = vrot.slane %v165, 2
      %v329 = vrot.slane %v166, 2
      %v330 = vsel %vm235, %v328, %v329
      %v331 = vrot.slane %v167, 2
      %v332 = vsel %vm235, %v329, %v331
      %v333 = vrot.slane %v168, 2
      %v334 = vrot.slane %v169, 2
      %v335 = vsel %vm235, %v333, %v334
      %v336 = vrot.slane %v170, 2
      %v337 = vsel %vm235, %v334, %v336
      %338 = vrot.lane.b32.xlu0 %v325, 127
      %v339 = vpop.permute.xlu0 %338
      %340 = vrot.lane.b32.xlu0 %v327, 127
      %v341 = vpop.permute.xlu0 %340
      %342 = vrot.lane.b32.xlu0 %v330, 127
      %v343 = vpop.permute.xlu0 %342
      %344 = vrot.lane.b32.xlu0 %v332, 127
      %v345 = vpop.permute.xlu0 %344
      %346 = vrot.lane.b32.xlu0 %v335, 127
      %v347 = vpop.permute.xlu0 %346
      %348 = vrot.lane.b32.xlu0 %v337, 127
      %v349 = vpop.permute.xlu0 %348
      %v356 = vadd.f32 %v317, %v339
      %v357 = vadd.f32 %v318, %v341
      %v358 = vadd.f32 %v319, %v343
      %v359 = vadd.f32 %v320, %v345
      %v360 = vadd.f32 %v321, %v347
      %v361 = vadd.f32 %v322, %v349
      %v362 = vadd.f32 %v356, %v264
      %v363 = vadd.f32 %v357, %v266
      %v364 = vadd.f32 %v358, %v268
      %v365 = vadd.f32 %v359, %v270
      %v366 = vadd.f32 %v360, %v272
      %v367 = vadd.f32 %v361, %v274
      %v368 = vmul.f32 %v283, %v366
      %v369 = vmul.f32 %v284, %v367
      %v370 = vmul.f32 %v285, %v364
      %v371 = vmul.f32 %v286, %v365
      %v372 = vsub.f32 %v368, %v370
      %v373 = vsub.f32 %v369, %v371
      %v374 = vmul.f32 %v285, %v362
      %v375 = vmul.f32 %v286, %v363
      %v376 = vmul.f32 %v281, %v366
      %v377 = vmul.f32 %v282, %v367
      %v378 = vsub.f32 %v374, %v376
      %v379 = vsub.f32 %v375, %v377
      %v380 = vmul.f32 %v281, %v364
      %v381 = vmul.f32 %v282, %v365
      %v382 = vmul.f32 %v283, %v362
      %v383 = vmul.f32 %v284, %v363
      %v384 = vsub.f32 %v380, %v382
      %v385 = vsub.f32 %v381, %v383
      %v386 = vmul.f32 %v372, %v372
      %v387 = vmul.f32 %v373, %v373
      %v388 = vmul.f32 %v378, %v378
      %v389 = vmul.f32 %v379, %v379
      %v390 = vadd.f32 %v386, %v388
      %v391 = vadd.f32 %v387, %v389
      %v392 = vmul.f32 %v384, %v384
      %v393 = vmul.f32 %v385, %v385
      %v394 = vadd.f32 %v390, %v392
      %v395 = vadd.f32 %v391, %v393
      %v396 = vrsqrt.pop %v394
      %v397 = vmul.f32 %v394, %v396
      %vm398 = vcmp.eq.f32.partialorder %v394, inf
      %v399 = vsel %vm398, %v394, %v397
      %vm400 = vcmp.eq.f32.partialorder %v394, 0.0
      %v401 = vand.u32 %v394, 2147483648
      %v402 = vsel %vm400, %v401, %v399
      %v403 = vrsqrt.pop %v395
      %v404 = vmul.f32 %v395, %v403
      %vm405 = vcmp.eq.f32.partialorder %v395, inf
      %v406 = vsel %vm405, %v395, %v404
      %vm407 = vcmp.eq.f32.partialorder %v395, 0.0
      %v408 = vand.u32 %v395, 2147483648
      %v409 = vsel %vm407, %v408, %v406
      %v410 = vadd.f32 %v402, 1e-08
      %v411 = vadd.f32 %v409, 1e-08
      %v412 = vrcp.pop %v410
      %v413 = vmul.f32 1.0, %v412
      %v414 = vrcp.pop %v411
      %v415 = vmul.f32 1.0, %v414
      %v416 = vmul.f32 %v372, %v413
      %v417 = vmul.f32 %v373, %v415
      %vm418 = vcmask 130048
      %419 = vst.msk [vmem:[%s116] sm:$0xff] %vm418, %v416
      %420 = vst.msk [vmem:[%s116 + $0x8] sm:$0xff] %vm418, %v417
      %v421 = vmul.f32 %v378, %v413
      %v422 = vmul.f32 %v379, %v415
      %s423 = scalar_lea.vmem %s116, 16
      %424 = vst.msk [vmem:[%s423] sm:$0xff] %vm418, %v421
      %425 = vst.msk [vmem:[%s423 + $0x8] sm:$0xff] %vm418, %v422
      %v426 = vmul.f32 %v384, %v413
      %v427 = vmul.f32 %v385, %v415
      %s428 = scalar_lea.vmem %s116, 32
      %429 = vst.msk [vmem:[%s428] sm:$0xff] %vm418, %v426
      %430 = vst.msk [vmem:[%s428 + $0x8] sm:$0xff] %vm418, %v427
      %p431 = scmp.lt.s32.totalorder %s12, 1
      %s432 = scalar_select %p431, %s12, 1
      %s433 = smul.addr %s432, 6
      %s434 = smul.addr %s433, 8
      %s435 = scalar_lea.vmem %s1, %s434
      // Predicated region
      $region25: #{inverse_icp_forward.4} parent=23 // pred_check
        %p436 = pneg %p56
      $region26: #{inverse_icp_forward.4} parent=23 // pred_check_branch
        %438 = sbr.rel (%p436) target = $region28
      $region27: #{inverse_icp_forward.4} parent=23 // pred_region
        _
      $region28: #{inverse_icp_forward.4} parent=23 // pred_fallthru
        _
    $region24: #{inverse_icp_forward.4} parent=5 // pred_fallthru
      _
    %p439 = scmp.le.s32.totalorder 2, %s7
    // Predicated region
    $region29: #{inverse_icp_forward.4} parent=5 // pred_check
      %p440 = pneg %p439
    $region30: #{inverse_icp_forward.4} parent=5 // pred_check_branch
      %442 = sbr.rel (%p440) target = $region32
    $region31: #{inverse_icp_forward.4} parent=5 // pred_region
      %s443 = ssub.s32 %s7, 2
      // Predicated region
      $region33: #{inverse_icp_forward.4} parent=31 // pred_check
        %p444 = pneg %p62
      $region34: #{inverse_icp_forward.4} parent=31 // pred_check_branch
        %446 = sbr.rel (%p444) target = $region36
      $region35: #{inverse_icp_forward.4} parent=31 // pred_region
        %p447 = scmp.lt.s32.totalorder %s13, 1
        %s448 = scalar_select %p447, %s13, 1
        %s449 = smul.addr %s448, 6
        %s450 = smul.addr %s449, 8
        %s451 = scalar_lea.vmem %s1, %s450
      $region36: #{inverse_icp_forward.4} parent=31 // pred_fallthru
        _
    $region32: #{inverse_icp_forward.4} parent=5 // pred_fallthru
      _
  $region6: #{inverse_icp_forward.4} parent=0 // loop_footer
    %s11 = sadd.s32 1, %s7
  $region7: #{inverse_icp_forward.4} parent=0 // loop_footer_branch
    %6 = sbr.rel target = $region3
  $region8: #{inverse_icp_forward.4} parent=0 // loop_exit
    _

// kernel: custom-call.54
$region0: #{custom-call.54}
  %s0 = inlined_call_operand.vmem [shape: f32[2,6,6], index: 0, kind: input, shape index: {}]
  %s1 = inlined_call_operand.vmem [shape: f32[2,6,6], index: 1, kind: output, shape index: {0}]
  %s2 = inlined_call_operand.hbm [shape: s32[2,6], index: 2, kind: output, shape index: {1}]
  %s3 = inlined_call_operand.vmem [shape: s32[2,6], index: 3, kind: output, shape index: {2}]
  %4 = xla_tuple %s1, %s2, %s3
  $region1: #{custom-call.54} parent=0
    #allocation0 [shape = 'u8[8192]{0}', space=vmem, size = 0x2000, scoped, tag = 'operand span for operand 0']
    #allocation1 [shape = 'u8[8192]{0}', space=vmem, size = 0x2000, scoped, tag = 'operand span for operand 1']
    #allocation2 [shape = 'u8[4096]{0}', space=vmem, size = 0x1000, scoped, tag = 'operand span for operand 2']
    #allocation3 [shape = 'u8[2048]{0}', space=vmem, size = 0x800, scoped, tag = 'packed  for operand 2']
    #allocation4 [shape = 's32[2]{0}', space=sflag, size = 0x8, scoped, tag = 'scoped memory for custom-call.54']
    #allocation5 [shape = 'u8[4096]{0}', space=vmem, size = 0x1000, scoped, tag = 'operand span for operand 3']
    #allocation6 [shape = 'u8[2048]{0}', space=vmem, size = 0x800, scoped, tag = 'packed  for operand 3']
    %5 = vsyncpa [#allocation4], 0
    %s6 = scalar_lea.sflag [#allocation4], 1
    %7 = vsyncpa %s6, 0
    loop: start=0, step=1, limit=4
    $region2: #{custom-call.54} parent=1 // loop_pre_header
      _
    $region3: #{custom-call.54} parent=1 // loop_header
      %s9 = sphi 0, %s13
      %p10 = scmp.ge.s32.totalorder %s9, 4
      %s21 = sphi 0, %s23
      %s24 = sphi 0, %s21
      %s25 = sphi 0, %s24
      %s41 = sphi 0, %s25
      %s49 = sphi 0, %s51
      %s52 = sphi 0, %s49
      %s53 = sphi 0, %s52
      %s69 = sphi 0, %s53
    $region4: #{custom-call.54} parent=1 // loop_header_branch
      %12 = sbr.rel (%p10) target = $region8
    $region5: #{custom-call.54} parent=1 // loop_body
      %s14 = ssub.s32 %s9, 1
      %s15 = ssub.s32 %s9, 2
      %s16 = sadd.s32 %s9, 1
      %s17 = sshrl.u32 %s9, 3
      %s18 = sshrl.u32 %s16, 3
      %s19 = ssub.s32 %s17, %s18
      %p20 = scmp.eq.s32.totalorder %s19, 0
      %s22 = sadd.s32 %s21, 1
      %s23 = scalar_select %p20, %s21, %s22
      %p26 = pneg %p20
      %p27 = scmp.eq.s32.totalorder %s9, 1
      %p28 = por %p26, %p27
      %p29 = scmp.ne.s32.totalorder %s21, %s24
      %p30 = scmp.eq.s32.totalorder %s9, 0
      %p31 = por %p29, %p30
      %p32 = scmp.ne.s32.totalorder %s21, %s24
      %p33 = scmp.eq.s32.totalorder %s14, 1
      %p34 = por %p32, %p33
      %p35 = scmp.ne.s32.totalorder %s24, %s25
      %p36 = scmp.eq.s32.totalorder %s14, 0
      %p37 = por %p35, %p36
      %p38 = scmp.ne.s32.totalorder %s24, %s25
      %p39 = scmp.eq.s32.totalorder %s15, 1
      %p40 = por %p38, %p39
      %p42 = scmp.ne.s32.totalorder %s25, %s41
      %p43 = scmp.eq.s32.totalorder %s15, 0
      %p44 = por %p42, %p43
      %s45 = sshrl.u32 %s9, 3
      %s46 = sshrl.u32 %s16, 3
      %s47 = ssub.s32 %s45, %s46
      %p48 = scmp.eq.s32.totalorder %s47, 0
      %s50 = sadd.s32 %s49, 1
      %s51 = scalar_select %p48, %s49, %s50
      %p54 = pneg %p48
      %p55 = scmp.eq.s32.totalorder %s9, 1
      %p56 = por %p54, %p55
      %p57 = scmp.ne.s32.totalorder %s49, %s52
      %p58 = scmp.eq.s32.totalorder %s9, 0
      %p59 = por %p57, %p58
      %p60 = scmp.ne.s32.totalorder %s49, %s52
      %p61 = scmp.eq.s32.totalorder %s14, 1
      %p62 = por %p60, %p61
      %p63 = scmp.ne.s32.totalorder %s52, %s53
      %p64 = scmp.eq.s32.totalorder %s14, 0
      %p65 = por %p63, %p64
      %p66 = scmp.ne.s32.totalorder %s52, %s53
      %p67 = scmp.eq.s32.totalorder %s15, 1
      %p68 = por %p66, %p67
      %p70 = scmp.ne.s32.totalorder %s53, %s69
      %p71 = scmp.eq.s32.totalorder %s15, 0
      %p72 = por %p70, %p71
      %p73 = scmp.le.s32.totalorder 1, %s9
      %p74 = scmp.lt.s32.totalorder %s9, 3
      %p75 = pnand %p73, %p74
      %p76 = pneg %p75
      // Predicated region
      $region9: #{custom-call.54} parent=5 // pred_check
        _
      $region10: #{custom-call.54} parent=5 // pred_check_branch
        %78 = sbr.rel (%p75) target = $region12
      $region11: #{custom-call.54} parent=5 // pred_region
        %s79 = ssub.s32 %s9, 1
      $region12: #{custom-call.54} parent=5 // pred_fallthru
        _
      %p80 = scmp.lt.s32.totalorder %s9, 2
      // Predicated region
      $region13: #{custom-call.54} parent=5 // pred_check
        %p81 = pneg %p80
      $region14: #{custom-call.54} parent=5 // pred_check_branch
        %83 = sbr.rel (%p81) target = $region16
      $region15: #{custom-call.54} parent=5 // pred_region
        %s84 = sand.u32 %s9, 1
        %s85 = sand.u32 %s9, 1
        %s86 = smul.addr %s85, 8
        %s87 = scalar_lea.vmem [#allocation0], %s86
        %s88 = smul.addr %s9, 8
        %s89 = scalar_lea.vmem %s0, %s88
        // Predicated region
        $region17: #{custom-call.54} parent=15 // pred_check
          _
        $region18: #{custom-call.54} parent=15 // pred_check_branch
          %91 = sbr.rel (0) target = $region20
        $region19: #{custom-call.54} parent=15 // pred_region
          // Predicated region
          $region21: #{custom-call.54} parent=19 // pred_check
            _
          $region22: #{custom-call.54} parent=19 // pred_check_branch
            %93 = sbr.rel (0) target = $region24
          $region23: #{custom-call.54} parent=19 // pred_region
            // Predicated region
            $region36: #{custom-call.54} parent=23 // pred_check
              _
            $region37: #{custom-call.54} parent=23 // pred_check_branch
              %108 = sbr.rel (0) target = $region39
            $region38: #{custom-call.54} parent=23 // pred_region
              loop: start=0, step=1, limit=1
              $region40: #{custom-call.54} parent=38 // loop_pre_header
                _
              $region41: #{custom-call.54} parent=38 // loop_header
                %s110 = sphi 0, %s114
                %p111 = scmp.ge.s32.totalorder %s110, 1
                %s115 = sphi %s89, %s89
                %s116 = sphi %s87, %s87
              $region42: #{custom-call.54} parent=38 // loop_header_branch
                %113 = sbr.rel (%p111) target = $region46
              $region43: #{custom-call.54} parent=38 // loop_body
                %v117 = vld [vmem:[%s115] sm:$0xff]
                %118 = vst [vmem:[%s116] sm:$0xff] %v117
              $region44: #{custom-call.54} parent=38 // loop_footer
                %s114 = sadd.s32 1, %s110
              $region45: #{custom-call.54} parent=38 // loop_footer_branch
                %109 = sbr.rel target = $region41
              $region46: #{custom-call.54} parent=38 // loop_exit
                _
            $region39: #{custom-call.54} parent=23 // pred_fallthru
              _
            // Predicated region
            $region47: #{custom-call.54} parent=23 // pred_check
              _
            $region48: #{custom-call.54} parent=23 // pred_check_branch
              %120 = sbr.rel target = $region50
            $region49: #{custom-call.54} parent=23 // pred_region
              _
            $region50: #{custom-call.54} parent=23 // pred_fallthru
              _
          $region24: #{custom-call.54} parent=19 // pred_fallthru
            _
          // Predicated region
          $region25: #{custom-call.54} parent=19 // pred_check
            _
          $region26: #{custom-call.54} parent=19 // pred_check_branch
            %95 = sbr.rel target = $region28
          $region27: #{custom-call.54} parent=19 // pred_region
            loop: start=0, step=1, limit=1
            $region29: #{custom-call.54} parent=27 // loop_pre_header
              _
            $region30: #{custom-call.54} parent=27 // loop_header
              %s98 = sphi 0, %s102
              %p99 = scmp.ge.s32.totalorder %s98, 1
              %s103 = sphi %s89, %s89
              %s104 = sphi %s87, %s87
            $region31: #{custom-call.54} parent=27 // loop_header_branch
              %101 = sbr.rel (%p99) target = $region35
            $region32: #{custom-call.54} parent=27 // loop_body
              %v105 = vld [vmem:[%s103] sm:$0xff]
              %106 = vst [vmem:[%s104] sm:$0xff] %v105
            $region33: #{custom-call.54} parent=27 // loop_footer
              %s102 = sadd.s32 1, %s98
            $region34: #{custom-call.54} parent=27 // loop_footer_branch
              %97 = sbr.rel target = $region30
            $region35: #{custom-call.54} parent=27 // loop_exit
              _
          $region28: #{custom-call.54} parent=19 // pred_fallthru
            _
        $region20: #{custom-call.54} parent=15 // pred_fallthru
          _
        %121 = vnop
      $region16: #{custom-call.54} parent=5 // pred_fallthru
        _
      %p122 = scmp.le.s32.totalorder 1, %s9
      %p123 = scmp.lt.s32.totalorder %s9, 3
      %p124 = pnand %p122, %p123
      %p125 = pneg %p124
      // Predicated region
      $region51: #{custom-call.54} parent=5 // pred_check
        _
      $region52: #{custom-call.54} parent=5 // pred_check_branch
        %127 = sbr.rel (%p124) target = $region54
      $region53: #{custom-call.54} parent=5 // pred_region
        #allocation7 [shape = 's32[6,128]{1,0}', space=vmem, size = 0x1000, scoped, tag = 'scratch for permutations']
        %s128 = ssub.s32 %s9, 1
        %s129 = sand.u32 %s14, 1
        %s130 = sand.u32 %s14, 1
        %s131 = smul.addr %s130, 8
        %s132 = scalar_lea.vmem [#allocation0], %s131
        %s133 = sand.u32 %s14, 1
        %s134 = sand.u32 %s14, 1
        %s135 = smul.addr %s134, 8
        %s136 = scalar_lea.vmem [#allocation0], %s135
        %s137 = sand.u32 %s14, 1
        %s138 = sand.u32 %s14, 1
        %s139 = smul.addr %s138, 8
        %s140 = scalar_lea.vmem [#allocation1], %s139
        %p141 = pneg %p37
        %p142 = pneg %p34
        %s143 = sand.u32 %s24, 1
        %s144 = scalar_lea.sflag [#allocation4], %s143
        %s145 = sand.u32 %s24, 1
        %s146 = smul.addr %s145, 2
        %s147 = scalar_lea.vmem [#allocation3], %s146
        %p148 = pneg %p65
        %p149 = pneg %p62
        %s150 = sand.u32 %s52, 1
        %s151 = sand.u32 %s52, 1
        %s152 = smul.addr %s151, 2
        %s153 = scalar_lea.vmem [#allocation6], %s152
        %s154 = sshrl.u32 %s14, 3
        %s155 = sshrl.u32 %s14, 3
        %v156 = vld [vmem:[%s132] sm:$0xff]
        %157 = vst [vmem:[%s140] sm:$0xff] %v156
        %s158 = sand.u32 %s14, 7
        %s159 = scalar_lea.vmem [#allocation2], %s158
        %s160 = sand.u32 %s14, 7
        %s161 = scalar_lea.vmem [#allocation5], %s160
        %162 = vst [vmem:[%s159] sm:$0x1] 0
        %v163 = vlaneseq
        %v164 = vshrl.u32 %v163, 7
        %v165 = vmov %v164
        %167 = vst [vmem:[#allocation7] sm:$0xff] %v165
        loop: start=0, step=1, limit=6
        $region56: #{custom-call.54} parent=53 // loop_pre_header
          _
        $region57: #{custom-call.54} parent=53 // loop_header
          %s169 = sphi 0, %s173
          %p170 = scmp.ge.s32.totalorder %s169, 6
        $region58: #{custom-call.54} parent=53 // loop_header_branch
          %172 = sbr.rel (%p170) target = $region62
        $region59: #{custom-call.54} parent=53 // loop_body
          %v174 = vstv %s169
          %v175 = vlaneseq
          %v176 = vshrl.u32 %v175, 7
          %v177 = vmov %v176
          %v178 = vld [vmem:[%s140] sm:$0xff]
          %v179 = vand.u32 2147483647, %v178
          %v181 = vstv %s169
          %vm182 = vcmp.ge.s32.totalorder %v177, %v181
          %vm183 = vcmp.lt.s32.totalorder %v177, 6
          %vm184 = vmand %vm182, %vm183
          %vm185 = vcmp.lt.f32.partialorder -inf, %v179
          %vm186 = vmand %vm184, %vm185
          %v187 = vsel %vm186, %v177, %v174
          %v188 = vsel %vm186, %v179, -inf
          %v189 = vrot.slane %v188, 1
          %v190 = vrot.slane %v187, 1
          %vm191 = vcmp.ge.f32.partialorder %v189, %v188
          %v192 = vsel %vm191, %v189, %v188
          %v193 = vsel %vm191, %v190, %v187
          %v194 = vrot.slane %v189, 1
          %v195 = vrot.slane %v190, 1
          %vm196 = vcmp.ge.f32.partialorder %v194, %v192
          %v197 = vsel %vm196, %v194, %v192
          %v198 = vsel %vm196, %v195, %v193
          %v199 = vrot.slane %v194, 1
          %v200 = vrot.slane %v195, 1
          %vm201 = vcmp.ge.f32.partialorder %v199, %v197
          %v202 = vsel %vm201, %v199, %v197
          %v203 = vsel %vm201, %v200, %v198
          %v204 = vrot.slane %v199, 1
          %v205 = vrot.slane %v200, 1
          %vm206 = vcmp.ge.f32.partialorder %v204, %v202
          %v207 = vsel %vm206, %v204, %v202
          %v208 = vsel %vm206, %v205, %v203
          %v209 = vrot.slane %v204, 1
          %v210 = vrot.slane %v205, 1
          %vm211 = vcmp.ge.f32.partialorder %v209, %v207
          %v212 = vsel %vm211, %v209, %v207
          %v213 = vsel %vm211, %v210, %v208
          %v214 = vrot.slane %v209, 1
          %v215 = vrot.slane %v210, 1
          %vm216 = vcmp.ge.f32.partialorder %v214, %v212
          %v217 = vsel %vm216, %v214, %v212
          %v218 = vsel %vm216, %v215, %v213
          %v219 = vrot.slane %v214, 1
          %v220 = vrot.slane %v215, 1
          %vm221 = vcmp.ge.f32.partialorder %v219, %v217
          %v222 = vsel %vm221, %v219, %v217
          %v223 = vsel %vm221, %v220, %v218
          %s224 = ssub.s32 128, %s169
          %225 = vrot.lane.b32.xlu0 %v223, %s224
          %v226 = vpop.permute.xlu0 %225
          %s227 = vtos %v226
          %v228 = vstv %s169
          %v229 = vlaneseq
          %v230 = vand.u32 %v229, 127
          %vm231 = vcmp.eq.s32.totalorder %v230, %v228
          %v232 = vstv %s227
          %v233 = vld [vmem:[%s159] ss:$0 sm:$0xff]
          %v234 = vsel %vm231, %v232, %v233
          %235 = vst [vmem:[%s159] sm:$0x1] %v234
          %s236 = scalar_lea.vmem %s140, %s169 [#allocation1]
          %s237 = scalar_lea.vmem %s140, %s227 [#allocation1]
          %v238 = vld [vmem:[%s236] ss:$0 sm:$0xff]
          %v239 = vld [vmem:[%s237] ss:$0 sm:$0xff]
          %240 = vst [vmem:[%s237] sm:$0x1] %v238
          %241 = vst [vmem:[%s236] sm:$0x1] %v239
          %s242 = scalar_lea.vmem [#allocation7], %s169
          %s243 = scalar_lea.vmem [#allocation7], %s227
          %v244 = vld [vmem:[%s242] ss:$0 sm:$0xff]
          %v245 = vld [vmem:[%s243] ss:$0 sm:$0xff]
          %246 = vst [vmem:[%s243] sm:$0x1] %v244
          %247 = vst [vmem:[%s242] sm:$0x1] %v245
          %vm248 = vcmp.ne.f32.partialorder %v239, 0.0
          %vm249 = vmand %vm231, %vm248
          %v250 = vsel %vm249, %v239, 1.0
          %v251 = vlaneseq
          %v252 = vand.u32 %v251, 127
          %v253 = vstv %s169
          %vm254 = vcmp.gt.s32.totalorder %v252, %v253
          %v255 = vsel %vm254, %v239, 0.0
          %v256 = vlaneseq
          %v257 = vshrl.u32 %v256, 7
          %v258 = vmov %v257
          %v259 = vld [vmem:[%s140] sm:$0xff]
          %v261 = vstv %s169
          %vm262 = vcmp.gt.s32.totalorder %v258, %v261
          %v263 = vsel %vm262, %v250, 1.0
          %v264 = vrcp.pop %v263
          %v265 = vmul.f32 %v259, %v264
          %vm266 = vmand %vm262, %vm231
          %v267 = vsel %vm266, %v265, 0.0
          %268 = vadd.xlane.f32.xlu0 %v267
          %v269 = vpop.xlane.xlu0 %268
          %v270 = vmul.f32 %v269, %v255
          %v271 = vsub.f32 %v265, %v270
          %272 = vst [vmem:[%s140] sm:$0xff] %v271
        $region60: #{custom-call.54} parent=53 // loop_footer
          %s173 = sadd.s32 1, %s169
        $region61: #{custom-call.54} parent=53 // loop_footer_branch
          %168 = sbr.rel target = $region57
        $region62: #{custom-call.54} parent=53 // loop_exit
          _
        %v273 = vld [vmem:[#allocation7] sm:$0xff]
        %s274 = scalar_lea.vmem [#allocation7], 8
        %s275 = scalar_lea.vmem [#allocation7], 16
        %s276 = scalar_lea.vmem [#allocation7], 24
        %s277 = scalar_lea.vmem [#allocation7], 32
        %s278 = scalar_lea.vmem [#allocation7], 40
        %s279 = scalar_lea.vmem [#allocation7], 48
        %s280 = scalar_lea.vmem [#allocation7], 56
        %s281 = scalar_lea.vmem [#allocation7], 64
        %s282 = scalar_lea.vmem [#allocation7], 72
        %s283 = scalar_lea.vmem [#allocation7], 80
        %s284 = scalar_lea.vmem [#allocation7], 88
        %s285 = scalar_lea.vmem [#allocation7], 96
        %s286 = scalar_lea.vmem [#allocation7], 104
        %s287 = scalar_lea.vmem [#allocation7], 112
        %s288 = scalar_lea.vmem [#allocation7], 120
        %289 = vxpose.xlu0.b32.start [1/16] %v273, 128
        %290 = vxpose.xlu0.b32.cont [2/16] 0, 128
        %291 = vxpose.xlu0.b32.cont [3/16] 0, 128
        %292 = vxpose.xlu0.b32.cont [4/16] 0, 128
        %293 = vxpose.xlu0.b32.cont [5/16] 0, 128
        %294 = vxpose.xlu0.b32.cont [6/16] 0, 128
        %295 = vxpose.xlu0.b32.cont [7/16] 0, 128
        %296 = vxpose.xlu0.b32.cont [8/16] 0, 128
        %297 = vxpose.xlu0.b32.cont [9/16] 0, 128
        %298 = vxpose.xlu0.b32.cont [10/16] 0, 128
        %299 = vxpose.xlu0.b32.cont [11/16] 0, 128
        %300 = vxpose.xlu0.b32.cont [12/16] 0, 128
        %301 = vxpose.xlu0.b32.cont [13/16] 0, 128
        %302 = vxpose.xlu0.b32.cont [14/16] 0, 128
        %303 = vxpose.xlu0.b32.cont [15/16] 0, 128
        %304 = vxpose.xlu0.b32.end [16/16] 0, 128
        %v305 = vpop.trf.xlu0
        %v306 = vpop.trf.xlu0
        %v307 = vpop.trf.xlu0
        %v308 = vpop.trf.xlu0
        %v309 = vpop.trf.xlu0
        %v310 = vpop.trf.xlu0
        %v311 = vpop.trf.xlu0
        %v312 = vpop.trf.xlu0
        %v313 = vpop.trf.xlu0
        %v314 = vpop.trf.xlu0
        %v315 = vpop.trf.xlu0
        %v316 = vpop.trf.xlu0
        %v317 = vpop.trf.xlu0
        %v318 = vpop.trf.xlu0
        %v319 = vpop.trf.xlu0
        %v320 = vpop.trf.xlu0
        %321 = vst [vmem:[%s161] sm:$0x1] %v305
        %s323 = sshllo.u32 0, 2
        %v325 = vld [vmem:[#allocation2] sm:%s323]
        %s326 = sshllo.u32 0, 2
        %327 = vst [vmem:[%s147] sm:%s326] %v325
        %s329 = sshllo.u32 0, 2
        %v331 = vld [vmem:[#allocation5] sm:%s329]
        %s332 = sshllo.u32 0, 2
        %333 = vst [vmem:[%s153] sm:%s332] %v331
        %s334 = sand.u32 %s14, 1
        %s335 = sand.u32 %s14, 1
        %s336 = smul.addr %s335, 8
        %s337 = scalar_lea.vmem [#allocation1], %s336
        %s338 = sand.u32 %s24, 1
        %s339 = scalar_lea.sflag [#allocation4], %s338
        %s340 = sand.u32 %s24, 1
        %s341 = smul.addr %s340, 2
        %s342 = scalar_lea.vmem [#allocation3], %s341
        %s343 = sand.u32 %s52, 1
        %s344 = sand.u32 %s52, 1
        %s345 = smul.addr %s344, 2
        %s346 = scalar_lea.vmem [#allocation6], %s345
        %s347 = smul.addr %s14, 8
        %s348 = scalar_lea.vmem %s1, %s347
        // Predicated region
        $region63: #{custom-call.54} parent=53 // pred_check
          _
        $region64: #{custom-call.54} parent=53 // pred_check_branch
          %350 = sbr.rel (0) target = $region66
        $region65: #{custom-call.54} parent=53 // pred_region
          // Predicated region
          $region67: #{custom-call.54} parent=65 // pred_check
            _
          $region68: #{custom-call.54} parent=65 // pred_check_branch
            %352 = sbr.rel (0) target = $region70
          $region69: #{custom-call.54} parent=65 // pred_region
            // Predicated region
            $region82: #{custom-call.54} parent=69 // pred_check
              _
            $region83: #{custom-call.54} parent=69 // pred_check_branch
              %367 = sbr.rel (0) target = $region85
            $region84: #{custom-call.54} parent=69 // pred_region
              loop: start=0, step=1, limit=1
              $region86: #{custom-call.54} parent=84 // loop_pre_header
                _
              $region87: #{custom-call.54} parent=84 // loop_header
                %s369 = sphi 0, %s373
                %p370 = scmp.ge.s32.totalorder %s369, 1
                %s374 = sphi %s337, %s337
                %s375 = sphi %s348, %s348
              $region88: #{custom-call.54} parent=84 // loop_header_branch
                %372 = sbr.rel (%p370) target = $region92
              $region89: #{custom-call.54} parent=84 // loop_body
                %v376 = vld [vmem:[%s374] sm:$0xff]
                %377 = vst [vmem:[%s375] sm:$0xff] %v376
              $region90: #{custom-call.54} parent=84 // loop_footer
                %s373 = sadd.s32 1, %s369
              $region91: #{custom-call.54} parent=84 // loop_footer_branch
                %368 = sbr.rel target = $region87
              $region92: #{custom-call.54} parent=84 // loop_exit
                _
            $region85: #{custom-call.54} parent=69 // pred_fallthru
              _
            // Predicated region
            $region93: #{custom-call.54} parent=69 // pred_check
              _
            $region94: #{custom-call.54} parent=69 // pred_check_branch
              %379 = sbr.rel target = $region96
            $region95: #{custom-call.54} parent=69 // pred_region
              _
            $region96: #{custom-call.54} parent=69 // pred_fallthru
              _
          $region70: #{custom-call.54} parent=65 // pred_fallthru
            _
          // Predicated region
          $region71: #{custom-call.54} parent=65 // pred_check
            _
          $region72: #{custom-call.54} parent=65 // pred_check_branch
            %354 = sbr.rel target = $region74
          $region73: #{custom-call.54} parent=65 // pred_region
            loop: start=0, step=1, limit=1
            $region75: #{custom-call.54} parent=73 // loop_pre_header
              _
            $region76: #{custom-call.54} parent=73 // loop_header
              %s357 = sphi 0, %s361
              %p358 = scmp.ge.s32.totalorder %s357, 1
              %s362 = sphi %s337, %s337
              %s363 = sphi %s348, %s348
            $region77: #{custom-call.54} parent=73 // loop_header_branch
              %360 = sbr.rel (%p358) target = $region81
            $region78: #{custom-call.54} parent=73 // loop_body
              %v364 = vld [vmem:[%s362] sm:$0xff]
              %365 = vst [vmem:[%s363] sm:$0xff] %v364
            $region79: #{custom-call.54} parent=73 // loop_footer
              %s361 = sadd.s32 1, %s357
            $region80: #{custom-call.54} parent=73 // loop_footer_branch
              %356 = sbr.rel target = $region76
            $region81: #{custom-call.54} parent=73 // loop_exit
              _
          $region74: #{custom-call.54} parent=65 // pred_fallthru
            _
        $region66: #{custom-call.54} parent=53 // pred_fallthru
          _
        %380 = vnop
        // Predicated region
        $region97: #{custom-call.54} parent=53 // pred_check
          %p381 = pneg %p34
        $region98: #{custom-call.54} parent=53 // pred_check_branch
          %383 = sbr.rel (%p381) target = $region100
        $region99: #{custom-call.54} parent=53 // pred_region
          %s384 = sshrl.u32 %s14, 3
          %s386 = ssub.s32 32, 32
          %387 = vsyncadd %s339, %s386
          %s388 = smul.addr %s384, 32
          %s389 = scalar_lea.hbm %s2, %s388
          %s391 = sshll.u32 %s342, 4
          %s392 = int_to_ptr.vmem [resolvable:$true] %s391
          %394 = dma.vmem_to_hbm [thread:$0]  %s392, 32, %s389, %s339
        $region100: #{custom-call.54} parent=53 // pred_fallthru
          _
        // Predicated region
        $region101: #{custom-call.54} parent=53 // pred_check
          %p395 = pneg %p62
        $region102: #{custom-call.54} parent=53 // pred_check_branch
          %397 = sbr.rel (%p395) target = $region104
        $region103: #{custom-call.54} parent=53 // pred_region
          %s398 = sshrl.u32 %s14, 3
          %s399 = smul.addr %s398, 2
          %s400 = scalar_lea.vmem %s3, %s399
          // Predicated region
          $region105: #{custom-call.54} parent=103 // pred_check
            _
          $region106: #{custom-call.54} parent=103 // pred_check_branch
            %402 = sbr.rel (0) target = $region108
          $region107: #{custom-call.54} parent=103 // pred_region
            // Predicated region
            $region109: #{custom-call.54} parent=107 // pred_check
              _
            $region110: #{custom-call.54} parent=107 // pred_check_branch
              %404 = sbr.rel target = $region112
            $region111: #{custom-call.54} parent=107 // pred_region
              // Predicated region
              $region124: #{custom-call.54} parent=111 // pred_check
                _
              $region125: #{custom-call.54} parent=111 // pred_check_branch
                %419 = sbr.rel (0) target = $region127
              $region126: #{custom-call.54} parent=111 // pred_region
                loop: start=0, step=1, limit=1
                $region128: #{custom-call.54} parent=126 // loop_pre_header
                  _
                $region129: #{custom-call.54} parent=126 // loop_header
                  %s422 = sphi 0, %s426
                  %p423 = scmp.ge.s32.totalorder %s422, 1
                  %s427 = sphi %s346, %s346
                  %s428 = sphi %s400, %s400
                $region130: #{custom-call.54} parent=126 // loop_header_branch
                  %425 = sbr.rel (%p423) target = $region134
                $region131: #{custom-call.54} parent=126 // loop_body
                  %v429 = vld [vmem:[%s427] sm:$0x3]
                  %430 = vst [vmem:[%s428] sm:$0x3] %v429
                $region132: #{custom-call.54} parent=126 // loop_footer
                  %s426 = sadd.s32 1, %s422
                $region133: #{custom-call.54} parent=126 // loop_footer_branch
                  %421 = sbr.rel target = $region129
                $region134: #{custom-call.54} parent=126 // loop_exit
                  _
              $region127: #{custom-call.54} parent=111 // pred_fallthru
                _
            $region112: #{custom-call.54} parent=107 // pred_fallthru
              _
            // Predicated region
            $region113: #{custom-call.54} parent=107 // pred_check
              _
            $region114: #{custom-call.54} parent=107 // pred_check_branch
              %406 = sbr.rel (0) target = $region116
            $region115: #{custom-call.54} parent=107 // pred_region
              loop: start=0, step=1, limit=1
              $region117: #{custom-call.54} parent=115 // loop_pre_header
                _
              $region118: #{custom-call.54} parent=115 // loop_header
                %s409 = sphi 0, %s413
                %p410 = scmp.ge.s32.totalorder %s409, 1
                %s414 = sphi %s346, %s346
                %s415 = sphi %s400, %s400
              $region119: #{custom-call.54} parent=115 // loop_header_branch
                %412 = sbr.rel (%p410) target = $region123
              $region120: #{custom-call.54} parent=115 // loop_body
                %v416 = vld [vmem:[%s414] sm:$0x3]
                %417 = vst [vmem:[%s415] sm:$0x3] %v416
              $region121: #{custom-call.54} parent=115 // loop_footer
                %s413 = sadd.s32 1, %s409
              $region122: #{custom-call.54} parent=115 // loop_footer_branch
                %408 = sbr.rel target = $region118
              $region123: #{custom-call.54} parent=115 // loop_exit
                _
            $region116: #{custom-call.54} parent=107 // pred_fallthru
              _
          $region108: #{custom-call.54} parent=103 // pred_fallthru
            _
          %431 = vnop
        $region104: #{custom-call.54} parent=53 // pred_fallthru
          _
      $region54: #{custom-call.54} parent=5 // pred_fallthru
        _
      %p432 = scmp.le.s32.totalorder 2, %s9
      // Predicated region
      $region135: #{custom-call.54} parent=5 // pred_check
        %p433 = pneg %p432
      $region136: #{custom-call.54} parent=5 // pred_check_branch
        %435 = sbr.rel (%p433) target = $region138
      $region137: #{custom-call.54} parent=5 // pred_region
        %s436 = ssub.s32 %s9, 2
        %s437 = sand.u32 %s15, 1
        %s438 = sand.u32 %s15, 1
        %s439 = smul.addr %s438, 8
        %s440 = scalar_lea.vmem [#allocation1], %s439
        // Predicated region
        $region139: #{custom-call.54} parent=137 // pred_check
          %p441 = pneg %p40
        $region140: #{custom-call.54} parent=137 // pred_check_branch
          %443 = sbr.rel (%p441) target = $region142
        $region141: #{custom-call.54} parent=137 // pred_region
          %s444 = sand.u32 %s25, 1
          %s445 = scalar_lea.sflag [#allocation4], %s444
          %s446 = sand.u32 %s25, 1
          %s447 = smul.addr %s446, 2
          %s448 = scalar_lea.vmem [#allocation3], %s447
          %449 = dma.done %s445, 32
        $region142: #{custom-call.54} parent=137 // pred_fallthru
          _
        // Predicated region
        $region143: #{custom-call.54} parent=137 // pred_check
          %p450 = pneg %p68
        $region144: #{custom-call.54} parent=137 // pred_check_branch
          %452 = sbr.rel (%p450) target = $region146
        $region145: #{custom-call.54} parent=137 // pred_region
          %s453 = sand.u32 %s53, 1
          %s454 = sand.u32 %s53, 1
          %s455 = smul.addr %s454, 2
          %s456 = scalar_lea.vmem [#allocation6], %s455
        $region146: #{custom-call.54} parent=137 // pred_fallthru
          _
      $region138: #{custom-call.54} parent=5 // pred_fallthru
        _
    $region6: #{custom-call.54} parent=1 // loop_footer
      %s13 = sadd.s32 1, %s9
    $region7: #{custom-call.54} parent=1 // loop_footer_branch
      %8 = sbr.rel target = $region3
    $region8: #{custom-call.54} parent=1 // loop_exit
      _
    %457 = vsyncpa [#allocation4], 1
    %s458 = scalar_lea.sflag [#allocation4], 1
    %459 = vsyncpa %s458, 1

// kernel: custom-call.55
$region0: #{custom-call.55}
  %s0 = inlined_call_operand.vmem [shape: f32[2,1,6,6], index: 0, kind: input, shape index: {}]
  %s1 = inlined_call_operand.vmem [shape: f32[2,1,6,6], index: 1, kind: output, shape index: {}]
  $region1: #{custom-call.55} parent=0
    #allocation0 [shape = 'u8[8192]{0}', space=vmem, size = 0x2000, scoped, tag = 'operand span for operand 0']
    #allocation1 [shape = 'u8[8192]{0}', space=vmem, size = 0x2000, scoped, tag = 'operand span for operand 1']
    loop: start=0, step=1, limit=4
    $region2: #{custom-call.55} parent=1 // loop_pre_header
      _
    $region3: #{custom-call.55} parent=1 // loop_header
      %s3 = sphi 0, %s7
      %p4 = scmp.ge.s32.totalorder %s3, 4
      %s10 = sphi 0, %s36
      %s11 = sphi 0, %s32
      %s12 = sphi 0, %s28
      %s13 = sphi 0, %s24
      %s14 = sphi 0, %s10
      %s15 = sphi 0, %s11
      %s16 = sphi 0, %s12
      %s17 = sphi 0, %s13
      %s18 = sphi 0, %s14
      %s19 = sphi 0, %s15
      %s20 = sphi 0, %s16
      %s21 = sphi 0, %s17
    $region4: #{custom-call.55} parent=1 // loop_header_branch
      %6 = sbr.rel (%p4) target = $region8
    $region5: #{custom-call.55} parent=1 // loop_body
      %s8 = ssub.s32 %s3, 1
      %s9 = ssub.s32 %s3, 2
      %s22 = sadd.s32 1, %s13
      %p23 = scmp.ge.s32.totalorder %s22, 1
      %s24 = scalar_select %p23, 0, %s22
      %s25 = sadd.s32 1, %s12
      %s26 = scalar_select %p23, %s25, %s12
      %p27 = scmp.ge.s32.totalorder %s26, 1
      %s28 = scalar_select %p27, 0, %s26
      %s29 = sadd.s32 1, %s11
      %s30 = scalar_select %p27, %s29, %s11
      %p31 = scmp.ge.s32.totalorder %s30, 1
      %s32 = scalar_select %p31, 0, %s30
      %s33 = sadd.s32 1, %s10
      %s34 = scalar_select %p31, %s33, %s10
      %p35 = scmp.ge.s32.totalorder %s34, 2
      %s36 = scalar_select %p35, 0, %s34
      %p37 = scmp.le.s32.totalorder 1, %s3
      %p38 = scmp.lt.s32.totalorder %s3, 3
      %p39 = pnand %p37, %p38
      %p40 = pneg %p39
      // Predicated region
      $region9: #{custom-call.55} parent=5 // pred_check
        _
      $region10: #{custom-call.55} parent=5 // pred_check_branch
        %42 = sbr.rel (%p39) target = $region12
      $region11: #{custom-call.55} parent=5 // pred_region
        %s43 = ssub.s32 %s3, 1
      $region12: #{custom-call.55} parent=5 // pred_fallthru
        _
      %p44 = scmp.lt.s32.totalorder %s3, 2
      // Predicated region
      $region13: #{custom-call.55} parent=5 // pred_check
        %p45 = pneg %p44
      $region14: #{custom-call.55} parent=5 // pred_check_branch
        %47 = sbr.rel (%p45) target = $region16
      $region15: #{custom-call.55} parent=5 // pred_region
        %s48 = sand.u32 %s3, 1
        %s49 = sand.u32 %s3, 1
        %s50 = smul.addr %s49, 8
        %s51 = scalar_lea.vmem [#allocation0], %s50
        %s52 = sadd.s32 %s13, %s12
        %s53 = sadd.s32 %s52, %s11
        %s54 = sadd.s32 %s53, %s10
        %s55 = smul.addr %s54, 8
        %s56 = scalar_lea.vmem %s0, %s55
        // Predicated region
        $region17: #{custom-call.55} parent=15 // pred_check
          _
        $region18: #{custom-call.55} parent=15 // pred_check_branch
          %58 = sbr.rel (0) target = $region20
        $region19: #{custom-call.55} parent=15 // pred_region
          // Predicated region
          $region21: #{custom-call.55} parent=19 // pred_check
            _
          $region22: #{custom-call.55} parent=19 // pred_check_branch
            %60 = sbr.rel (0) target = $region24
          $region23: #{custom-call.55} parent=19 // pred_region
            // Predicated region
            $region36: #{custom-call.55} parent=23 // pred_check
              _
            $region37: #{custom-call.55} parent=23 // pred_check_branch
              %75 = sbr.rel (0) target = $region39
            $region38: #{custom-call.55} parent=23 // pred_region
              loop: start=0, step=1, limit=1
              $region40: #{custom-call.55} parent=38 // loop_pre_header
                _
              $region41: #{custom-call.55} parent=38 // loop_header
                %s77 = sphi 0, %s81
                %p78 = scmp.ge.s32.totalorder %s77, 1
                %s82 = sphi %s56, %s56
                %s83 = sphi %s51, %s51
              $region42: #{custom-call.55} parent=38 // loop_header_branch
                %80 = sbr.rel (%p78) target = $region46
              $region43: #{custom-call.55} parent=38 // loop_body
                %v84 = vld [vmem:[%s82] sm:$0xff]
                %85 = vst [vmem:[%s83] sm:$0xff] %v84
              $region44: #{custom-call.55} parent=38 // loop_footer
                %s81 = sadd.s32 1, %s77
              $region45: #{custom-call.55} parent=38 // loop_footer_branch
                %76 = sbr.rel target = $region41
              $region46: #{custom-call.55} parent=38 // loop_exit
                _
            $region39: #{custom-call.55} parent=23 // pred_fallthru
              _
            // Predicated region
            $region47: #{custom-call.55} parent=23 // pred_check
              _
            $region48: #{custom-call.55} parent=23 // pred_check_branch
              %87 = sbr.rel target = $region50
            $region49: #{custom-call.55} parent=23 // pred_region
              _
            $region50: #{custom-call.55} parent=23 // pred_fallthru
              _
          $region24: #{custom-call.55} parent=19 // pred_fallthru
            _
          // Predicated region
          $region25: #{custom-call.55} parent=19 // pred_check
            _
          $region26: #{custom-call.55} parent=19 // pred_check_branch
            %62 = sbr.rel target = $region28
          $region27: #{custom-call.55} parent=19 // pred_region
            loop: start=0, step=1, limit=1
            $region29: #{custom-call.55} parent=27 // loop_pre_header
              _
            $region30: #{custom-call.55} parent=27 // loop_header
              %s65 = sphi 0, %s69
              %p66 = scmp.ge.s32.totalorder %s65, 1
              %s70 = sphi %s56, %s56
              %s71 = sphi %s51, %s51
            $region31: #{custom-call.55} parent=27 // loop_header_branch
              %68 = sbr.rel (%p66) target = $region35
            $region32: #{custom-call.55} parent=27 // loop_body
              %v72 = vld [vmem:[%s70] sm:$0xff]
              %73 = vst [vmem:[%s71] sm:$0xff] %v72
            $region33: #{custom-call.55} parent=27 // loop_footer
              %s69 = sadd.s32 1, %s65
            $region34: #{custom-call.55} parent=27 // loop_footer_branch
              %64 = sbr.rel target = $region30
            $region35: #{custom-call.55} parent=27 // loop_exit
              _
          $region28: #{custom-call.55} parent=19 // pred_fallthru
            _
        $region20: #{custom-call.55} parent=15 // pred_fallthru
          _
        %88 = vnop
      $region16: #{custom-call.55} parent=5 // pred_fallthru
        _
      %p89 = scmp.le.s32.totalorder 1, %s3
      %p90 = scmp.lt.s32.totalorder %s3, 3
      %p91 = pnand %p89, %p90
      %p92 = pneg %p91
      // Predicated region
      $region51: #{custom-call.55} parent=5 // pred_check
        _
      $region52: #{custom-call.55} parent=5 // pred_check_branch
        %94 = sbr.rel (%p91) target = $region54
      $region53: #{custom-call.55} parent=5 // pred_region
        #allocation2 [shape = 'f32[6,6]{1,0}', space=vmem, size = 0x1000, scoped, tag = 'rescaled input a']
        %s95 = ssub.s32 %s3, 1
        %s96 = sand.u32 %s8, 1
        %s97 = sand.u32 %s8, 1
        %s98 = smul.addr %s97, 8
        %s99 = scalar_lea.vmem [#allocation0], %s98
        %s100 = sand.u32 %s8, 1
        %s101 = sand.u32 %s8, 1
        %s102 = smul.addr %s101, 8
        %s103 = scalar_lea.vmem [#allocation0], %s102
        %s104 = sand.u32 %s8, 1
        %s105 = sand.u32 %s8, 1
        %s106 = smul.addr %s105, 8
        %s107 = scalar_lea.vmem [#allocation1], %s106
        %v108 = vlaneseq
        %v109 = vand.u32 %v108, 127
        %vm110 = vcmp.lt.s32.totalorder %v109, 6
        %v111 = vlaneseq
        %v112 = vshrl.u32 %v111, 7
        %vm114 = vcmp.eq.s32.totalorder %v112, %v109
        %v115 = vld [vmem:[%s99] sm:$0xff]
        %v116 = vsel %vm114, %v115, 0.0
        %117 = vadd.xlane.f32.xlu0 %v116
        %v118 = vpop.xlane.xlu0 %117
        %vm119 = vcmp.le.s32.totalorder %v112, %v109
        %vm120 = vmand %vm119, %vm110
        %v121 = vsel %vm120, %v115, 0.0
        %v122 = vrcp.pop %v118
        %v123 = vmul.f32 %v121, %v122
        %124 = vst [vmem:[#allocation2] sm:$0xff] %v123
        %v125 = vlaneseq
        %v126 = vand.u32 %v125, 127
        %v127 = vlaneseq
        %v128 = vshrl.u32 %v127, 7
        %vm130 = vcmp.eq.s32.totalorder %v126, %v128
        %v131 = vlaneseq
        %v132 = vand.u32 %v131, 127
        %vm133 = vcmp.eq.s32.totalorder %v132, 5
        %v134 = vsel %vm133, 1.0, -1.0
        %v135 = vsel %vm130, %v134, 0.0
        %s136 = scalar_lea.vmem [#allocation2], 4
        %v137 = vld [vmem:[%s136] ss:$0 sm:$0xff]
        %v138 = vxor.u32 %v137, 2147483648
        %v139 = vlaneseq
        %v140 = vand.u32 %v139, 127
        %vm141 = vcmp.eq.s32.totalorder %v140, 4
        %v142 = vmul.f32 %v138, %v135
        %143 = vadd.xlane.f32.xlu0 %v142
        %v144 = vpop.xlane.xlu0 %143
        %v145 = vsel %vm141, %v144, %v135
        %s146 = scalar_lea.vmem [#allocation2], 3
        %v147 = vld [vmem:[%s146] ss:$0 sm:$0xff]
        %v148 = vxor.u32 %v147, 2147483648
        %v149 = vlaneseq
        %v150 = vand.u32 %v149, 127
        %vm151 = vcmp.eq.s32.totalorder %v150, 3
        %v152 = vmul.f32 %v148, %v145
        %153 = vadd.xlane.f32.xlu0 %v152
        %v154 = vpop.xlane.xlu0 %153
        %v155 = vsel %vm151, %v154, %v145
        %s156 = scalar_lea.vmem [#allocation2], 2
        %v157 = vld [vmem:[%s156] ss:$0 sm:$0xff]
        %v158 = vxor.u32 %v157, 2147483648
        %v159 = vlaneseq
        %v160 = vand.u32 %v159, 127
        %vm161 = vcmp.eq.s32.totalorder %v160, 2
        %v162 = vmul.f32 %v158, %v155
        %163 = vadd.xlane.f32.xlu0 %v162
        %v164 = vpop.xlane.xlu0 %163
        %v165 = vsel %vm161, %v164, %v155
        %s166 = scalar_lea.vmem [#allocation2], 1
        %v167 = vld [vmem:[%s166] ss:$0 sm:$0xff]
        %v168 = vxor.u32 %v167, 2147483648
        %v169 = vlaneseq
        %v170 = vand.u32 %v169, 127
        %vm171 = vcmp.eq.s32.totalorder %v170, 1
        %v172 = vmul.f32 %v168, %v165
        %173 = vadd.xlane.f32.xlu0 %v172
        %v174 = vpop.xlane.xlu0 %173
        %v175 = vsel %vm171, %v174, %v165
        %v176 = vld [vmem:[#allocation2] ss:$0 sm:$0xff]
        %v177 = vxor.u32 %v176, 2147483648
        %v178 = vlaneseq
        %v179 = vand.u32 %v178, 127
        %vm180 = vcmp.eq.s32.totalorder %v179, 0
        %v181 = vmul.f32 %v177, %v175
        %182 = vadd.xlane.f32.xlu0 %v181
        %v183 = vpop.xlane.xlu0 %182
        %v184 = vsel %vm180, %v183, %v175
        %v185 = vrcp.pop %v118
        %v186 = vmul.f32 %v184, %v185
        %vm187 = vweird.f32 %v118
        %v188 = vsel %vm187, %v184, %v186
        %189 = vst [vmem:[%s107] sm:$0xff] %v188
        %s190 = sand.u32 %s8, 1
        %s191 = sand.u32 %s8, 1
        %s192 = smul.addr %s191, 8
        %s193 = scalar_lea.vmem [#allocation1], %s192
        %s194 = sadd.s32 %s17, %s16
        %s195 = sadd.s32 %s194, %s15
        %s196 = sadd.s32 %s195, %s14
        %s197 = smul.addr %s196, 8
        %s198 = scalar_lea.vmem %s1, %s197
        // Predicated region
        $region55: #{custom-call.55} parent=53 // pred_check
          _
        $region56: #{custom-call.55} parent=53 // pred_check_branch
          %200 = sbr.rel (0) target = $region58
        $region57: #{custom-call.55} parent=53 // pred_region
          // Predicated region
          $region59: #{custom-call.55} parent=57 // pred_check
            _
          $region60: #{custom-call.55} parent=57 // pred_check_branch
            %202 = sbr.rel (0) target = $region62
          $region61: #{custom-call.55} parent=57 // pred_region
            // Predicated region
            $region74: #{custom-call.55} parent=61 // pred_check
              _
            $region75: #{custom-call.55} parent=61 // pred_check_branch
              %217 = sbr.rel (0) target = $region77
            $region76: #{custom-call.55} parent=61 // pred_region
              loop: start=0, step=1, limit=1
              $region78: #{custom-call.55} parent=76 // loop_pre_header
                _
              $region79: #{custom-call.55} parent=76 // loop_header
                %s219 = sphi 0, %s223
                %p220 = scmp.ge.s32.totalorder %s219, 1
                %s224 = sphi %s193, %s193
                %s225 = sphi %s198, %s198
              $region80: #{custom-call.55} parent=76 // loop_header_branch
                %222 = sbr.rel (%p220) target = $region84
              $region81: #{custom-call.55} parent=76 // loop_body
                %v226 = vld [vmem:[%s224] sm:$0xff]
                %227 = vst [vmem:[%s225] sm:$0xff] %v226
              $region82: #{custom-call.55} parent=76 // loop_footer
                %s223 = sadd.s32 1, %s219
              $region83: #{custom-call.55} parent=76 // loop_footer_branch
                %218 = sbr.rel target = $region79
              $region84: #{custom-call.55} parent=76 // loop_exit
                _
            $region77: #{custom-call.55} parent=61 // pred_fallthru
              _
            // Predicated region
            $region85: #{custom-call.55} parent=61 // pred_check
              _
            $region86: #{custom-call.55} parent=61 // pred_check_branch
              %229 = sbr.rel target = $region88
            $region87: #{custom-call.55} parent=61 // pred_region
              _
            $region88: #{custom-call.55} parent=61 // pred_fallthru
              _
          $region62: #{custom-call.55} parent=57 // pred_fallthru
            _
          // Predicated region
          $region63: #{custom-call.55} parent=57 // pred_check
            _
          $region64: #{custom-call.55} parent=57 // pred_check_branch
            %204 = sbr.rel target = $region66
          $region65: #{custom-call.55} parent=57 // pred_region
            loop: start=0, step=1, limit=1
            $region67: #{custom-call.55} parent=65 // loop_pre_header
              _
            $region68: #{custom-call.55} parent=65 // loop_header
              %s207 = sphi 0, %s211
              %p208 = scmp.ge.s32.totalorder %s207, 1
              %s212 = sphi %s193, %s193
              %s213 = sphi %s198, %s198
            $region69: #{custom-call.55} parent=65 // loop_header_branch
              %210 = sbr.rel (%p208) target = $region73
            $region70: #{custom-call.55} parent=65 // loop_body
              %v214 = vld [vmem:[%s212] sm:$0xff]
              %215 = vst [vmem:[%s213] sm:$0xff] %v214
            $region71: #{custom-call.55} parent=65 // loop_footer
              %s211 = sadd.s32 1, %s207
            $region72: #{custom-call.55} parent=65 // loop_footer_branch
              %206 = sbr.rel target = $region68
            $region73: #{custom-call.55} parent=65 // loop_exit
              _
          $region66: #{custom-call.55} parent=57 // pred_fallthru
            _
        $region58: #{custom-call.55} parent=53 // pred_fallthru
          _
        %230 = vnop
      $region54: #{custom-call.55} parent=5 // pred_fallthru
        _
      %p231 = scmp.le.s32.totalorder 2, %s3
      // Predicated region
      $region89: #{custom-call.55} parent=5 // pred_check
        %p232 = pneg %p231
      $region90: #{custom-call.55} parent=5 // pred_check_branch
        %234 = sbr.rel (%p232) target = $region92
      $region91: #{custom-call.55} parent=5 // pred_region
        %s235 = ssub.s32 %s3, 2
        %s236 = sand.u32 %s9, 1
        %s237 = sand.u32 %s9, 1
        %s238 = smul.addr %s237, 8
        %s239 = scalar_lea.vmem [#allocation1], %s238
      $region92: #{custom-call.55} parent=5 // pred_fallthru
        _
    $region6: #{custom-call.55} parent=1 // loop_footer
      %s7 = sadd.s32 1, %s3
    $region7: #{custom-call.55} parent=1 // loop_footer_branch
      %2 = sbr.rel target = $region3
    $region8: #{custom-call.55} parent=1 // loop_exit
      _

// kernel: custom-call.56
$region0: #{custom-call.56}
  %s0 = inlined_call_operand.vmem [shape: f32[2,1,6,6], index: 0, kind: input, shape index: {}]
  %s1 = inlined_call_operand.vmem [shape: f32[2,1,6,6], index: 1, kind: output, shape index: {}]
  $region1: #{custom-call.56} parent=0
    #allocation0 [shape = 'u8[8192]{0}', space=vmem, size = 0x2000, scoped, tag = 'operand span for operand 0']
    #allocation1 [shape = 'u8[8192]{0}', space=vmem, size = 0x2000, scoped, tag = 'operand span for operand 1']
    loop: start=0, step=1, limit=4
    $region2: #{custom-call.56} parent=1 // loop_pre_header
      _
    $region3: #{custom-call.56} parent=1 // loop_header
      %s3 = sphi 0, %s7
      %p4 = scmp.ge.s32.totalorder %s3, 4
      %s10 = sphi 0, %s36
      %s11 = sphi 0, %s32
      %s12 = sphi 0, %s28
      %s13 = sphi 0, %s24
      %s14 = sphi 0, %s10
      %s15 = sphi 0, %s11
      %s16 = sphi 0, %s12
      %s17 = sphi 0, %s13
      %s18 = sphi 0, %s14
      %s19 = sphi 0, %s15
      %s20 = sphi 0, %s16
      %s21 = sphi 0, %s17
    $region4: #{custom-call.56} parent=1 // loop_header_branch
      %6 = sbr.rel (%p4) target = $region8
    $region5: #{custom-call.56} parent=1 // loop_body
      %s8 = ssub.s32 %s3, 1
      %s9 = ssub.s32 %s3, 2
      %s22 = sadd.s32 1, %s13
      %p23 = scmp.ge.s32.totalorder %s22, 1
      %s24 = scalar_select %p23, 0, %s22
      %s25 = sadd.s32 1, %s12
      %s26 = scalar_select %p23, %s25, %s12
      %p27 = scmp.ge.s32.totalorder %s26, 1
      %s28 = scalar_select %p27, 0, %s26
      %s29 = sadd.s32 1, %s11
      %s30 = scalar_select %p27, %s29, %s11
      %p31 = scmp.ge.s32.totalorder %s30, 1
      %s32 = scalar_select %p31, 0, %s30
      %s33 = sadd.s32 1, %s10
      %s34 = scalar_select %p31, %s33, %s10
      %p35 = scmp.ge.s32.totalorder %s34, 2
      %s36 = scalar_select %p35, 0, %s34
      %p37 = scmp.le.s32.totalorder 1, %s3
      %p38 = scmp.lt.s32.totalorder %s3, 3
      %p39 = pnand %p37, %p38
      %p40 = pneg %p39
      // Predicated region
      $region9: #{custom-call.56} parent=5 // pred_check
        _
      $region10: #{custom-call.56} parent=5 // pred_check_branch
        %42 = sbr.rel (%p39) target = $region12
      $region11: #{custom-call.56} parent=5 // pred_region
        %s43 = ssub.s32 %s3, 1
      $region12: #{custom-call.56} parent=5 // pred_fallthru
        _
      %p44 = scmp.lt.s32.totalorder %s3, 2
      // Predicated region
      $region13: #{custom-call.56} parent=5 // pred_check
        %p45 = pneg %p44
      $region14: #{custom-call.56} parent=5 // pred_check_branch
        %47 = sbr.rel (%p45) target = $region16
      $region15: #{custom-call.56} parent=5 // pred_region
        %s48 = sand.u32 %s3, 1
        %s49 = sand.u32 %s3, 1
        %s50 = smul.addr %s49, 8
        %s51 = scalar_lea.vmem [#allocation0], %s50
        %s52 = sadd.s32 %s13, %s12
        %s53 = sadd.s32 %s52, %s11
        %s54 = sadd.s32 %s53, %s10
        %s55 = smul.addr %s54, 8
        %s56 = scalar_lea.vmem %s0, %s55
        // Predicated region
        $region17: #{custom-call.56} parent=15 // pred_check
          _
        $region18: #{custom-call.56} parent=15 // pred_check_branch
          %58 = sbr.rel (0) target = $region20
        $region19: #{custom-call.56} parent=15 // pred_region
          // Predicated region
          $region21: #{custom-call.56} parent=19 // pred_check
            _
          $region22: #{custom-call.56} parent=19 // pred_check_branch
            %60 = sbr.rel (0) target = $region24
          $region23: #{custom-call.56} parent=19 // pred_region
            // Predicated region
            $region36: #{custom-call.56} parent=23 // pred_check
              _
            $region37: #{custom-call.56} parent=23 // pred_check_branch
              %75 = sbr.rel (0) target = $region39
            $region38: #{custom-call.56} parent=23 // pred_region
              loop: start=0, step=1, limit=1
              $region40: #{custom-call.56} parent=38 // loop_pre_header
                _
              $region41: #{custom-call.56} parent=38 // loop_header
                %s77 = sphi 0, %s81
                %p78 = scmp.ge.s32.totalorder %s77, 1
                %s82 = sphi %s56, %s56
                %s83 = sphi %s51, %s51
              $region42: #{custom-call.56} parent=38 // loop_header_branch
                %80 = sbr.rel (%p78) target = $region46
              $region43: #{custom-call.56} parent=38 // loop_body
                %v84 = vld [vmem:[%s82] sm:$0xff]
                %85 = vst [vmem:[%s83] sm:$0xff] %v84
              $region44: #{custom-call.56} parent=38 // loop_footer
                %s81 = sadd.s32 1, %s77
              $region45: #{custom-call.56} parent=38 // loop_footer_branch
                %76 = sbr.rel target = $region41
              $region46: #{custom-call.56} parent=38 // loop_exit
                _
            $region39: #{custom-call.56} parent=23 // pred_fallthru
              _
            // Predicated region
            $region47: #{custom-call.56} parent=23 // pred_check
              _
            $region48: #{custom-call.56} parent=23 // pred_check_branch
              %87 = sbr.rel target = $region50
            $region49: #{custom-call.56} parent=23 // pred_region
              _
            $region50: #{custom-call.56} parent=23 // pred_fallthru
              _
          $region24: #{custom-call.56} parent=19 // pred_fallthru
            _
          // Predicated region
          $region25: #{custom-call.56} parent=19 // pred_check
            _
          $region26: #{custom-call.56} parent=19 // pred_check_branch
            %62 = sbr.rel target = $region28
          $region27: #{custom-call.56} parent=19 // pred_region
            loop: start=0, step=1, limit=1
            $region29: #{custom-call.56} parent=27 // loop_pre_header
              _
            $region30: #{custom-call.56} parent=27 // loop_header
              %s65 = sphi 0, %s69
              %p66 = scmp.ge.s32.totalorder %s65, 1
              %s70 = sphi %s56, %s56
              %s71 = sphi %s51, %s51
            $region31: #{custom-call.56} parent=27 // loop_header_branch
              %68 = sbr.rel (%p66) target = $region35
            $region32: #{custom-call.56} parent=27 // loop_body
              %v72 = vld [vmem:[%s70] sm:$0xff]
              %73 = vst [vmem:[%s71] sm:$0xff] %v72
            $region33: #{custom-call.56} parent=27 // loop_footer
              %s69 = sadd.s32 1, %s65
            $region34: #{custom-call.56} parent=27 // loop_footer_branch
              %64 = sbr.rel target = $region30
            $region35: #{custom-call.56} parent=27 // loop_exit
              _
          $region28: #{custom-call.56} parent=19 // pred_fallthru
            _
        $region20: #{custom-call.56} parent=15 // pred_fallthru
          _
        %88 = vnop
      $region16: #{custom-call.56} parent=5 // pred_fallthru
        _
      %p89 = scmp.le.s32.totalorder 1, %s3
      %p90 = scmp.lt.s32.totalorder %s3, 3
      %p91 = pnand %p89, %p90
      %p92 = pneg %p91
      // Predicated region
      $region51: #{custom-call.56} parent=5 // pred_check
        _
      $region52: #{custom-call.56} parent=5 // pred_check_branch
        %94 = sbr.rel (%p91) target = $region54
      $region53: #{custom-call.56} parent=5 // pred_region
        #allocation2 [shape = 'f32[6,6]{1,0}', space=vmem, size = 0x1000, scoped, tag = 'rescaled input a']
        %s95 = ssub.s32 %s3, 1
        %s96 = sand.u32 %s8, 1
        %s97 = sand.u32 %s8, 1
        %s98 = smul.addr %s97, 8
        %s99 = scalar_lea.vmem [#allocation0], %s98
        %s100 = sand.u32 %s8, 1
        %s101 = sand.u32 %s8, 1
        %s102 = smul.addr %s101, 8
        %s103 = scalar_lea.vmem [#allocation0], %s102
        %s104 = sand.u32 %s8, 1
        %s105 = sand.u32 %s8, 1
        %s106 = smul.addr %s105, 8
        %s107 = scalar_lea.vmem [#allocation1], %s106
        %v108 = vlaneseq
        %v109 = vand.u32 %v108, 127
        %vm110 = vcmp.lt.s32.totalorder %v109, 6
        %v111 = vlaneseq
        %v112 = vshrl.u32 %v111, 7
        %vm114 = vcmp.eq.s32.totalorder %v112, %v109
        %v115 = vld [vmem:[%s99] sm:$0xff]
        %v116 = vsel %vm114, %v115, 0.0
        %117 = vadd.xlane.f32.xlu0 %v116
        %v118 = vpop.xlane.xlu0 %117
        %vm119 = vcmp.ge.s32.totalorder %v112, %v109
        %vm120 = vmand %vm119, %vm110
        %v121 = vsel %vm120, %v115, 0.0
        %v122 = vrcp.pop %v118
        %v123 = vmul.f32 %v121, %v122
        %124 = vst [vmem:[#allocation2] sm:$0xff] %v123
        %v125 = vlaneseq
        %v126 = vand.u32 %v125, 127
        %v127 = vlaneseq
        %v128 = vshrl.u32 %v127, 7
        %vm130 = vcmp.eq.s32.totalorder %v126, %v128
        %v131 = vlaneseq
        %v132 = vand.u32 %v131, 127
        %vm133 = vcmp.eq.s32.totalorder %v132, 0
        %v134 = vsel %vm133, 1.0, -1.0
        %v135 = vsel %vm130, %v134, 0.0
        %s136 = scalar_lea.vmem [#allocation2], 1
        %v137 = vld [vmem:[%s136] ss:$0 sm:$0xff]
        %v138 = vxor.u32 %v137, 2147483648
        %v139 = vlaneseq
        %v140 = vand.u32 %v139, 127
        %vm141 = vcmp.eq.s32.totalorder %v140, 1
        %v142 = vmul.f32 %v138, %v135
        %143 = vadd.xlane.f32.xlu0 %v142
        %v144 = vpop.xlane.xlu0 %143
        %v145 = vsel %vm141, %v144, %v135
        %s146 = scalar_lea.vmem [#allocation2], 2
        %v147 = vld [vmem:[%s146] ss:$0 sm:$0xff]
        %v148 = vxor.u32 %v147, 2147483648
        %v149 = vlaneseq
        %v150 = vand.u32 %v149, 127
        %vm151 = vcmp.eq.s32.totalorder %v150, 2
        %v152 = vmul.f32 %v148, %v145
        %153 = vadd.xlane.f32.xlu0 %v152
        %v154 = vpop.xlane.xlu0 %153
        %v155 = vsel %vm151, %v154, %v145
        %s156 = scalar_lea.vmem [#allocation2], 3
        %v157 = vld [vmem:[%s156] ss:$0 sm:$0xff]
        %v158 = vxor.u32 %v157, 2147483648
        %v159 = vlaneseq
        %v160 = vand.u32 %v159, 127
        %vm161 = vcmp.eq.s32.totalorder %v160, 3
        %v162 = vmul.f32 %v158, %v155
        %163 = vadd.xlane.f32.xlu0 %v162
        %v164 = vpop.xlane.xlu0 %163
        %v165 = vsel %vm161, %v164, %v155
        %s166 = scalar_lea.vmem [#allocation2], 4
        %v167 = vld [vmem:[%s166] ss:$0 sm:$0xff]
        %v168 = vxor.u32 %v167, 2147483648
        %v169 = vlaneseq
        %v170 = vand.u32 %v169, 127
        %vm171 = vcmp.eq.s32.totalorder %v170, 4
        %v172 = vmul.f32 %v168, %v165
        %173 = vadd.xlane.f32.xlu0 %v172
        %v174 = vpop.xlane.xlu0 %173
        %v175 = vsel %vm171, %v174, %v165
        %s176 = scalar_lea.vmem [#allocation2], 5
        %v177 = vld [vmem:[%s176] ss:$0 sm:$0xff]
        %v178 = vxor.u32 %v177, 2147483648
        %v179 = vlaneseq
        %v180 = vand.u32 %v179, 127
        %vm181 = vcmp.eq.s32.totalorder %v180, 5
        %v182 = vmul.f32 %v178, %v175
        %183 = vadd.xlane.f32.xlu0 %v182
        %v184 = vpop.xlane.xlu0 %183
        %v185 = vsel %vm181, %v184, %v175
        %v186 = vrcp.pop %v118
        %v187 = vmul.f32 %v185, %v186
        %vm188 = vweird.f32 %v118
        %v189 = vsel %vm188, %v185, %v187
        %190 = vst [vmem:[%s107] sm:$0xff] %v189
        %s191 = sand.u32 %s8, 1
        %s192 = sand.u32 %s8, 1
        %s193 = smul.addr %s192, 8
        %s194 = scalar_lea.vmem [#allocation1], %s193
        %s195 = sadd.s32 %s17, %s16
        %s196 = sadd.s32 %s195, %s15
        %s197 = sadd.s32 %s196, %s14
        %s198 = smul.addr %s197, 8
        %s199 = scalar_lea.vmem %s1, %s198
        // Predicated region
        $region55: #{custom-call.56} parent=53 // pred_check
          _
        $region56: #{custom-call.56} parent=53 // pred_check_branch
          %201 = sbr.rel (0) target = $region58
        $region57: #{custom-call.56} parent=53 // pred_region
          // Predicated region
          $region59: #{custom-call.56} parent=57 // pred_check
            _
          $region60: #{custom-call.56} parent=57 // pred_check_branch
            %203 = sbr.rel (0) target = $region62
          $region61: #{custom-call.56} parent=57 // pred_region
            // Predicated region
            $region74: #{custom-call.56} parent=61 // pred_check
              _
            $region75: #{custom-call.56} parent=61 // pred_check_branch
              %218 = sbr.rel (0) target = $region77
            $region76: #{custom-call.56} parent=61 // pred_region
              loop: start=0, step=1, limit=1
              $region78: #{custom-call.56} parent=76 // loop_pre_header
                _
              $region79: #{custom-call.56} parent=76 // loop_header
                %s220 = sphi 0, %s224
                %p221 = scmp.ge.s32.totalorder %s220, 1
                %s225 = sphi %s194, %s194
                %s226 = sphi %s199, %s199
              $region80: #{custom-call.56} parent=76 // loop_header_branch
                %223 = sbr.rel (%p221) target = $region84
              $region81: #{custom-call.56} parent=76 // loop_body
                %v227 = vld [vmem:[%s225] sm:$0xff]
                %228 = vst [vmem:[%s226] sm:$0xff] %v227
              $region82: #{custom-call.56} parent=76 // loop_footer
                %s224 = sadd.s32 1, %s220
              $region83: #{custom-call.56} parent=76 // loop_footer_branch
                %219 = sbr.rel target = $region79
              $region84: #{custom-call.56} parent=76 // loop_exit
                _
            $region77: #{custom-call.56} parent=61 // pred_fallthru
              _
            // Predicated region
            $region85: #{custom-call.56} parent=61 // pred_check
              _
            $region86: #{custom-call.56} parent=61 // pred_check_branch
              %230 = sbr.rel target = $region88
            $region87: #{custom-call.56} parent=61 // pred_region
              _
            $region88: #{custom-call.56} parent=61 // pred_fallthru
              _
          $region62: #{custom-call.56} parent=57 // pred_fallthru
            _
          // Predicated region
          $region63: #{custom-call.56} parent=57 // pred_check
            _
          $region64: #{custom-call.56} parent=57 // pred_check_branch
            %205 = sbr.rel target = $region66
          $region65: #{custom-call.56} parent=57 // pred_region
            loop: start=0, step=1, limit=1
            $region67: #{custom-call.56} parent=65 // loop_pre_header
              _
            $region68: #{custom-call.56} parent=65 // loop_header
              %s208 = sphi 0, %s212
              %p209 = scmp.ge.s32.totalorder %s208, 1
              %s213 = sphi %s194, %s194
              %s214 = sphi %s199, %s199
            $region69: #{custom-call.56} parent=65 // loop_header_branch
              %211 = sbr.rel (%p209) target = $region73
            $region70: #{custom-call.56} parent=65 // loop_body
              %v215 = vld [vmem:[%s213] sm:$0xff]
              %216 = vst [vmem:[%s214] sm:$0xff] %v215
            $region71: #{custom-call.56} parent=65 // loop_footer
              %s212 = sadd.s32 1, %s208
            $region72: #{custom-call.56} parent=65 // loop_footer_branch
              %207 = sbr.rel target = $region68
            $region73: #{custom-call.56} parent=65 // loop_exit
              _
          $region66: #{custom-call.56} parent=57 // pred_fallthru
            _
        $region58: #{custom-call.56} parent=53 // pred_fallthru
          _
        %231 = vnop
      $region54: #{custom-call.56} parent=5 // pred_fallthru
        _
      %p232 = scmp.le.s32.totalorder 2, %s3
      // Predicated region
      $region89: #{custom-call.56} parent=5 // pred_check
        %p233 = pneg %p232
      $region90: #{custom-call.56} parent=5 // pred_check_branch
        %235 = sbr.rel (%p233) target = $region92
      $region91: #{custom-call.56} parent=5 // pred_region
        %s236 = ssub.s32 %s3, 2
        %s237 = sand.u32 %s9, 1
        %s238 = sand.u32 %s9, 1
        %s239 = smul.addr %s238, 8
        %s240 = scalar_lea.vmem [#allocation1], %s239
      $region92: #{custom-call.56} parent=5 // pred_fallthru
        _
    $region6: #{custom-call.56} parent=1 // loop_footer
      %s7 = sadd.s32 1, %s3
    $region7: #{custom-call.56} parent=1 // loop_footer_branch
      %2 = sbr.rel target = $region3
    $region8: #{custom-call.56} parent=1 // loop_exit
      _

// kernel: neg.0
$region0: #{neg.0}
  #allocation0 [shape = 's32[1]{0}', space=sflag, size = 0x4, scoped, tag = 'scoped memory for neg.0']
  %s0 = inlined_call_operand.vmem [shape: f32[2,3], index: 0, kind: input, shape index: {}]
  %s1 = inlined_call_operand.vmem [shape: f32[2,3], index: 1, kind: output, shape index: {}]
  %v2 = vld [vmem:[%s0] sm:$0x3]
  %3 = xla_tuple %v2
  %4 = xla_tuple %3
  %v5 = vxor.u32 %v2, 2147483648
  %6 = xla_tuple %v5
  %7 = vst [vmem:[%s1] sm:$0x3] %v5

// kernel: inverse_icp_forward.5
$region0: #{inverse_icp_forward.5}
  #allocation0 [shape = 'u32[]', space=smem, size = 0x4, offset = 0x4, fixed_abs, tag = 'smem constant byte address 0x4 - core index']
  #allocation1 [shape = 'u32[144,128]{1,0:T(1,128)}', space=vmem, size = 0x12000, scoped, tag = 'internal scratch']
  #allocation2 [shape = 'f32[6,256]{1,0:T(8,128)}', space=vmem, size = 0x2000, scoped, tag = 'scratch operand']
  %s0 = inlined_call_operand.vmem [shape: f32[2,3,256], index: 0, kind: input, shape index: {}]
  %s1 = inlined_call_operand.vmem [shape: f32[2,3,256], index: 1, kind: input, shape index: {}]
  %s2 = inlined_call_operand.vmem [shape: f32[2,3,256], index: 2, kind: input, shape index: {}]
  %s3 = inlined_call_operand.vmem [shape: f32[2,3,256], index: 3, kind: input, shape index: {}]
  %s4 = inlined_call_operand.vmem [shape: f32[2,1,256], index: 4, kind: input, shape index: {}]
  %s5 = inlined_call_operand.vmem [shape: f32[2,9], index: 5, kind: input, shape index: {}]
  %s6 = inlined_call_operand.vmem [shape: f32[2,6,6], index: 6, kind: output, shape index: {0}]
  %s7 = inlined_call_operand.vmem [shape: f32[2,6,1], index: 7, kind: output, shape index: {1}]
  %8 = xla_tuple %s6, %s7
  %s9 = sld [smem:[#allocation0]]
  $region73: #{inverse_icp_forward.5} parent=0
    _
  %s11 = ssub.s32 1, %s9
  %s12 = scalar_select 0, %s11, %s9
  $region1: #{inverse_icp_forward.5} parent=0
    #allocation3 [shape = 'u8[1024]{0}', space=smem, size = 0x400, scoped, tag = 'input window, operand 5, single buffered']
    #allocation4 [shape = 's32[2]{0}', space=sflag, size = 0x8, scoped, tag = 'scoped memory for inverse_icp_forward.5']
    %13 = vsyncpa [#allocation4], 0
    loop: start=0, step=1, limit=4
    $region2: #{inverse_icp_forward.5} parent=1 // loop_pre_header
      _
    $region3: #{inverse_icp_forward.5} parent=1 // loop_header
      %s15 = sphi 0, %s19
      %p16 = scmp.ge.s32.totalorder %s15, 4
      %s22 = sphi 0, %s34
      %s23 = sphi 0, %s30
      %s24 = sphi 0, %s22
      %s25 = sphi 0, %s23
      %s26 = sphi 0, %s24
      %s27 = sphi 0, %s25
      %s39 = sphi 0, %s41
      %s42 = sphi 0, %s39
      %s43 = sphi 0, %s42
      %s59 = sphi 0, %s43
      %s67 = sphi 0, %s69
      %s70 = sphi 0, %s67
      %s71 = sphi 0, %s70
      %s87 = sphi 0, %s71
      %s95 = sphi 0, %s97
      %s98 = sphi 0, %s95
      %s99 = sphi 0, %s98
      %s115 = sphi 0, %s99
      %s123 = sphi 0, %s125
      %s126 = sphi 0, %s123
      %s127 = sphi 0, %s126
      %s143 = sphi 0, %s127
      %s151 = sphi 0, %s153
      %s154 = sphi 0, %s151
      %s155 = sphi 0, %s154
      %s171 = sphi 0, %s155
      %s175 = sphi 0, %s175
      %s177 = sphi 0, %s175
      %s178 = sphi 0, %s177
      %s192 = sphi 0, %s178
      %s198 = sphi 0, %s200
      %s201 = sphi 0, %s198
      %s202 = sphi 0, %s201
      %s218 = sphi 0, %s202
      %s224 = sphi 0, %s226
      %s227 = sphi 0, %s224
      %s228 = sphi 0, %s227
      %s244 = sphi 0, %s228
    $region4: #{inverse_icp_forward.5} parent=1 // loop_header_branch
      %18 = sbr.rel (%p16) target = $region8
    $region5: #{inverse_icp_forward.5} parent=1 // loop_body
      %s20 = ssub.s32 %s15, 1
      %s21 = ssub.s32 %s15, 2
      %s28 = sadd.s32 1, %s23
      %p29 = scmp.ge.s32.totalorder %s28, 1
      %s30 = scalar_select %p29, 0, %s28
      %s31 = sadd.s32 1, %s22
      %s32 = scalar_select %p29, %s31, %s22
      %p33 = scmp.ge.s32.totalorder %s32, 2
      %s34 = scalar_select %p33, 0, %s32
      %s35 = ssub.s32 %s22, %s34
      %s36 = ssub.s32 %s23, %s30
      %s37 = sor.u32 %s35, %s36
      %p38 = scmp.eq.s32.totalorder %s37, 0
      %s40 = sadd.s32 %s39, 1
      %s41 = scalar_select %p38, %s39, %s40
      %p44 = pneg %p38
      %p45 = scmp.eq.s32.totalorder %s15, 1
      %p46 = por %p44, %p45
      %p47 = scmp.ne.s32.totalorder %s39, %s42
      %p48 = scmp.eq.s32.totalorder %s15, 0
      %p49 = por %p47, %p48
      %p50 = scmp.ne.s32.totalorder %s39, %s42
      %p51 = scmp.eq.s32.totalorder %s20, 1
      %p52 = por %p50, %p51
      %p53 = scmp.ne.s32.totalorder %s42, %s43
      %p54 = scmp.eq.s32.totalorder %s20, 0
      %p55 = por %p53, %p54
      %p56 = scmp.ne.s32.totalorder %s42, %s43
      %p57 = scmp.eq.s32.totalorder %s21, 1
      %p58 = por %p56, %p57
      %p60 = scmp.ne.s32.totalorder %s43, %s59
      %p61 = scmp.eq.s32.totalorder %s21, 0
      %p62 = por %p60, %p61
      %s63 = ssub.s32 %s22, %s34
      %s64 = ssub.s32 %s23, %s30
      %s65 = sor.u32 %s63, %s64
      %p66 = scmp.eq.s32.totalorder %s65, 0
      %s68 = sadd.s32 %s67, 1
      %s69 = scalar_select %p66, %s67, %s68
      %p72 = pneg %p66
      %p73 = scmp.eq.s32.totalorder %s15, 1
      %p74 = por %p72, %p73
      %p75 = scmp.ne.s32.totalorder %s67, %s70
      %p76 = scmp.eq.s32.totalorder %s15, 0
      %p77 = por %p75, %p76
      %p78 = scmp.ne.s32.totalorder %s67, %s70
      %p79 = scmp.eq.s32.totalorder %s20, 1
      %p80 = por %p78, %p79
      %p81 = scmp.ne.s32.totalorder %s70, %s71
      %p82 = scmp.eq.s32.totalorder %s20, 0
      %p83 = por %p81, %p82
      %p84 = scmp.ne.s32.totalorder %s70, %s71
      %p85 = scmp.eq.s32.totalorder %s21, 1
      %p86 = por %p84, %p85
      %p88 = scmp.ne.s32.totalorder %s71, %s87
      %p89 = scmp.eq.s32.totalorder %s21, 0
      %p90 = por %p88, %p89
      %s91 = ssub.s32 %s22, %s34
      %s92 = ssub.s32 %s23, %s30
      %s93 = sor.u32 %s91, %s92
      %p94 = scmp.eq.s32.totalorder %s93, 0
      %s96 = sadd.s32 %s95, 1
      %s97 = scalar_select %p94, %s95, %s96
      %p100 = pneg %p94
      %p101 = scmp.eq.s32.totalorder %s15, 1
      %p102 = por %p100, %p101
      %p103 = scmp.ne.s32.totalorder %s95, %s98
      %p104 = scmp.eq.s32.totalorder %s15, 0
      %p105 = por %p103, %p104
      %p106 = scmp.ne.s32.totalorder %s95, %s98
      %p107 = scmp.eq.s32.totalorder %s20, 1
      %p108 = por %p106, %p107
      %p109 = scmp.ne.s32.totalorder %s98, %s99
      %p110 = scmp.eq.s32.totalorder %s20, 0
      %p111 = por %p109, %p110
      %p112 = scmp.ne.s32.totalorder %s98, %s99
      %p113 = scmp.eq.s32.totalorder %s21, 1
      %p114 = por %p112, %p113
      %p116 = scmp.ne.s32.totalorder %s99, %s115
      %p117 = scmp.eq.s32.totalorder %s21, 0
      %p118 = por %p116, %p117
      %s119 = ssub.s32 %s22, %s34
      %s120 = ssub.s32 %s23, %s30
      %s121 = sor.u32 %s119, %s120
      %p122 = scmp.eq.s32.totalorder %s121, 0
      %s124 = sadd.s32 %s123, 1
      %s125 = scalar_select %p122, %s123, %s124
      %p128 = pneg %p122
      %p129 = scmp.eq.s32.totalorder %s15, 1
      %p130 = por %p128, %p129
      %p131 = scmp.ne.s32.totalorder %s123, %s126
      %p132 = scmp.eq.s32.totalorder %s15, 0
      %p133 = por %p131, %p132
      %p134 = scmp.ne.s32.totalorder %s123, %s126
      %p135 = scmp.eq.s32.totalorder %s20, 1
      %p136 = por %p134, %p135
      %p137 = scmp.ne.s32.totalorder %s126, %s127
      %p138 = scmp.eq.s32.totalorder %s20, 0
      %p139 = por %p137, %p138
      %p140 = scmp.ne.s32.totalorder %s126, %s127
      %p141 = scmp.eq.s32.totalorder %s21, 1
      %p142 = por %p140, %p141
      %p144 = scmp.ne.s32.totalorder %s127, %s143
      %p145 = scmp.eq.s32.totalorder %s21, 0
      %p146 = por %p144, %p145
      %s147 = ssub.s32 %s22, %s34
      %s148 = ssub.s32 %s23, %s30
      %s149 = sor.u32 %s147, %s148
      %p150 = scmp.eq.s32.totalorder %s149, 0
      %s152 = sadd.s32 %s151, 1
      %s153 = scalar_select %p150, %s151, %s152
      %p156 = pneg %p150
      %p157 = scmp.eq.s32.totalorder %s15, 1
      %p158 = por %p156, %p157
      %p159 = scmp.ne.s32.totalorder %s151, %s154
      %p160 = scmp.eq.s32.totalorder %s15, 0
      %p161 = por %p159, %p160
      %p162 = scmp.ne.s32.totalorder %s151, %s154
      %p163 = scmp.eq.s32.totalorder %s20, 1
      %p164 = por %p162, %p163
      %p165 = scmp.ne.s32.totalorder %s154, %s155
      %p166 = scmp.eq.s32.totalorder %s20, 0
      %p167 = por %p165, %p166
      %p168 = scmp.ne.s32.totalorder %s154, %s155
      %p169 = scmp.eq.s32.totalorder %s21, 1
      %p170 = por %p168, %p169
      %p172 = scmp.ne.s32.totalorder %s155, %s171
      %p173 = scmp.eq.s32.totalorder %s21, 0
      %p174 = por %p172, %p173
      %s176 = sadd.s32 %s175, 1
      %p179 = scmp.eq.s32.totalorder %s15, 1
      %p180 = scmp.ne.s32.totalorder %s175, %s177
      %p181 = scmp.eq.s32.totalorder %s15, 0
      %p182 = por %p180, %p181
      %p183 = scmp.ne.s32.totalorder %s175, %s177
      %p184 = scmp.eq.s32.totalorder %s20, 1
      %p185 = por %p183, %p184
      %p186 = scmp.ne.s32.totalorder %s177, %s178
      %p187 = scmp.eq.s32.totalorder %s20, 0
      %p188 = por %p186, %p187
      %p189 = scmp.ne.s32.totalorder %s177, %s178
      %p190 = scmp.eq.s32.totalorder %s21, 1
      %p191 = por %p189, %p190
      %p193 = scmp.ne.s32.totalorder %s178, %s192
      %p194 = scmp.eq.s32.totalorder %s21, 0
      %p195 = por %p193, %p194
      %s196 = ssub.s32 %s22, %s34
      %p197 = scmp.eq.s32.totalorder %s196, 0
      %s199 = sadd.s32 %s198, 1
      %s200 = scalar_select %p197, %s198, %s199
      %p203 = pneg %p197
      %p204 = scmp.eq.s32.totalorder %s15, 1
      %p205 = por %p203, %p204
      %p206 = scmp.ne.s32.totalorder %s198, %s201
      %p207 = scmp.eq.s32.totalorder %s15, 0
      %p208 = por %p206, %p207
      %p209 = scmp.ne.s32.totalorder %s198, %s201
      %p210 = scmp.eq.s32.totalorder %s20, 1
      %p211 = por %p209, %p210
      %p212 = scmp.ne.s32.totalorder %s201, %s202
      %p213 = scmp.eq.s32.totalorder %s20, 0
      %p214 = por %p212, %p213
      %p215 = scmp.ne.s32.totalorder %s201, %s202
      %p216 = scmp.eq.s32.totalorder %s21, 1
      %p217 = por %p215, %p216
      %p219 = scmp.ne.s32.totalorder %s202, %s218
      %p220 = scmp.eq.s32.totalorder %s21, 0
      %p221 = por %p219, %p220
      %s222 = ssub.s32 %s22, %s34
      %p223 = scmp.eq.s32.totalorder %s222, 0
      %s225 = sadd.s32 %s224, 1
      %s226 = scalar_select %p223, %s224, %s225
      %p229 = pneg %p223
      %p230 = scmp.eq.s32.totalorder %s15, 1
      %p231 = por %p229, %p230
      %p232 = scmp.ne.s32.totalorder %s224, %s227
      %p233 = scmp.eq.s32.totalorder %s15, 0
      %p234 = por %p232, %p233
      %p235 = scmp.ne.s32.totalorder %s224, %s227
      %p236 = scmp.eq.s32.totalorder %s20, 1
      %p237 = por %p235, %p236
      %p238 = scmp.ne.s32.totalorder %s227, %s228
      %p239 = scmp.eq.s32.totalorder %s20, 0
      %p240 = por %p238, %p239
      %p241 = scmp.ne.s32.totalorder %s227, %s228
      %p242 = scmp.eq.s32.totalorder %s21, 1
      %p243 = por %p241, %p242
      %p245 = scmp.ne.s32.totalorder %s228, %s244
      %p246 = scmp.eq.s32.totalorder %s21, 0
      %p247 = por %p245, %p246
      %p248 = scmp.le.s32.totalorder 1, %s15
      %p249 = scmp.lt.s32.totalorder %s15, 3
      %p250 = pnand %p248, %p249
      %p251 = pneg %p250
      // Predicated region
      $region9: #{inverse_icp_forward.5} parent=5 // pred_check
        _
      $region10: #{inverse_icp_forward.5} parent=5 // pred_check_branch
        %253 = sbr.rel (%p250) target = $region12
      $region11: #{inverse_icp_forward.5} parent=5 // pred_region
        %s254 = ssub.s32 %s15, 1
        // Predicated region
        $region13: #{inverse_icp_forward.5} parent=11 // pred_check
          %p255 = pneg %p188
        $region14: #{inverse_icp_forward.5} parent=11 // pred_check_branch
          %257 = sbr.rel (%p255) target = $region16
        $region15: #{inverse_icp_forward.5} parent=11 // pred_region
          %s259 = ssub.s32 32, 32
          %260 = vsyncadd [#allocation4], %s259
          %s262 = sshll.u32 %s5, 4
          %s263 = int_to_ptr.vmem [resolvable:$true] %s262
          %265 = dma.vmem_to_smem %s263, 32, [#allocation3], [#allocation4]
        $region16: #{inverse_icp_forward.5} parent=11 // pred_fallthru
          _
      $region12: #{inverse_icp_forward.5} parent=5 // pred_fallthru
        _
      %p266 = scmp.lt.s32.totalorder %s15, 2
      // Predicated region
      $region17: #{inverse_icp_forward.5} parent=5 // pred_check
        %p267 = pneg %p266
      $region18: #{inverse_icp_forward.5} parent=5 // pred_check_branch
        %269 = sbr.rel (%p267) target = $region20
      $region19: #{inverse_icp_forward.5} parent=5 // pred_region
        // Predicated region
        $region21: #{inverse_icp_forward.5} parent=19 // pred_check
          %p270 = pneg %p49
        $region22: #{inverse_icp_forward.5} parent=19 // pred_check_branch
          %272 = sbr.rel (%p270) target = $region24
        $region23: #{inverse_icp_forward.5} parent=19 // pred_region
          %s273 = smul.u32 2, %s23
          %p274 = scmp.lt.s32.totalorder %s22, 1
          %s275 = scalar_select %p274, %s22, 1
          %p276 = scmp.lt.s32.totalorder %s273, 1
          %s277 = scalar_select %p276, %s273, 1
          %s278 = smul.addr %s275, 2
          %s279 = sadd.s32 %s277, %s278
          %s280 = smul.addr %s279, 4
          %s281 = scalar_lea.vmem %s0, %s280
          %s282 = smul.u32 2, %s23
        $region24: #{inverse_icp_forward.5} parent=19 // pred_fallthru
          _
        // Predicated region
        $region25: #{inverse_icp_forward.5} parent=19 // pred_check
          %p283 = pneg %p77
        $region26: #{inverse_icp_forward.5} parent=19 // pred_check_branch
          %285 = sbr.rel (%p283) target = $region28
        $region27: #{inverse_icp_forward.5} parent=19 // pred_region
          %s286 = smul.u32 2, %s23
          %p287 = scmp.lt.s32.totalorder %s22, 1
          %s288 = scalar_select %p287, %s22, 1
          %p289 = scmp.lt.s32.totalorder %s286, 1
          %s290 = scalar_select %p289, %s286, 1
          %s291 = smul.addr %s288, 2
          %s292 = sadd.s32 %s290, %s291
          %s293 = smul.addr %s292, 4
          %s294 = scalar_lea.vmem %s1, %s293
          %s295 = smul.u32 2, %s23
        $region28: #{inverse_icp_forward.5} parent=19 // pred_fallthru
          _
        // Predicated region
        $region29: #{inverse_icp_forward.5} parent=19 // pred_check
          %p296 = pneg %p105
        $region30: #{inverse_icp_forward.5} parent=19 // pred_check_branch
          %298 = sbr.rel (%p296) target = $region32
        $region31: #{inverse_icp_forward.5} parent=19 // pred_region
          %s299 = smul.u32 2, %s23
          %p300 = scmp.lt.s32.totalorder %s22, 1
          %s301 = scalar_select %p300, %s22, 1
          %p302 = scmp.lt.s32.totalorder %s299, 1
          %s303 = scalar_select %p302, %s299, 1
          %s304 = smul.addr %s301, 2
          %s305 = sadd.s32 %s303, %s304
          %s306 = smul.addr %s305, 4
          %s307 = scalar_lea.vmem %s2, %s306
          %s308 = smul.u32 2, %s23
        $region32: #{inverse_icp_forward.5} parent=19 // pred_fallthru
          _
        // Predicated region
        $region33: #{inverse_icp_forward.5} parent=19 // pred_check
          %p309 = pneg %p133
        $region34: #{inverse_icp_forward.5} parent=19 // pred_check_branch
          %311 = sbr.rel (%p309) target = $region36
        $region35: #{inverse_icp_forward.5} parent=19 // pred_region
          %s312 = smul.u32 2, %s23
          %p313 = scmp.lt.s32.totalorder %s22, 1
          %s314 = scalar_select %p313, %s22, 1
          %p315 = scmp.lt.s32.totalorder %s312, 1
          %s316 = scalar_select %p315, %s312, 1
          %s317 = smul.addr %s314, 2
          %s318 = sadd.s32 %s316, %s317
          %s319 = smul.addr %s318, 4
          %s320 = scalar_lea.vmem %s3, %s319
          %s321 = smul.u32 2, %s23
        $region36: #{inverse_icp_forward.5} parent=19 // pred_fallthru
          _
        // Predicated region
        $region37: #{inverse_icp_forward.5} parent=19 // pred_check
          %p322 = pneg %p161
        $region38: #{inverse_icp_forward.5} parent=19 // pred_check_branch
          %324 = sbr.rel (%p322) target = $region40
        $region39: #{inverse_icp_forward.5} parent=19 // pred_region
          %s325 = smul.u32 2, %s23
          %p326 = scmp.lt.s32.totalorder %s22, 1
          %s327 = scalar_select %p326, %s22, 1
          %p328 = scmp.lt.s32.totalorder %s325, 1
          %s329 = scalar_select %p328, %s325, 1
          %s330 = smul.addr %s327, 2
          %s331 = sadd.s32 %s329, %s330
          %s332 = scalar_lea.vmem %s4, %s331
          %s333 = smul.u32 2, %s23
        $region40: #{inverse_icp_forward.5} parent=19 // pred_fallthru
          _
      $region20: #{inverse_icp_forward.5} parent=5 // pred_fallthru
        _
      %p334 = scmp.le.s32.totalorder 1, %s15
      %p335 = scmp.lt.s32.totalorder %s15, 3
      %p336 = pnand %p334, %p335
      %p337 = pneg %p336
      // Predicated region
      $region41: #{inverse_icp_forward.5} parent=5 // pred_check
        _
      $region42: #{inverse_icp_forward.5} parent=5 // pred_check_branch
        %339 = sbr.rel (%p336) target = $region44
      $region43: #{inverse_icp_forward.5} parent=5 // pred_region
        %s340 = ssub.s32 %s15, 1
        // Predicated region
        $region45: #{inverse_icp_forward.5} parent=43 // pred_check
          %p341 = pneg %p188
        $region46: #{inverse_icp_forward.5} parent=43 // pred_check_branch
          %343 = sbr.rel (%p341) target = $region48
        $region47: #{inverse_icp_forward.5} parent=43 // pred_region
          %344 = dma.done [#allocation4], 32
        $region48: #{inverse_icp_forward.5} parent=43 // pred_fallthru
          _
        %345 = sfence
        %s346 = smul.u32 2, %s25
        %p347 = scmp.lt.s32.totalorder %s24, 1
        %s348 = scalar_select %p347, %s24, 1
        %p349 = scmp.lt.s32.totalorder %s346, 1
        %s350 = scalar_select %p349, %s346, 1
        %s351 = smul.addr %s348, 2
        %s352 = sadd.s32 %s350, %s351
        %s353 = smul.addr %s352, 4
        %s354 = scalar_lea.vmem %s0, %s353
        %p355 = pneg %p55
        %p356 = pneg %p52
        %s357 = smul.u32 2, %s25
        %p358 = scmp.lt.s32.totalorder %s24, 1
        %s359 = scalar_select %p358, %s24, 1
        %p360 = scmp.lt.s32.totalorder %s357, 1
        %s361 = scalar_select %p360, %s357, 1
        %s362 = smul.addr %s359, 2
        %s363 = sadd.s32 %s361, %s362
        %s364 = smul.addr %s363, 4
        %s365 = scalar_lea.vmem %s1, %s364
        %p366 = pneg %p83
        %p367 = pneg %p80
        %s368 = smul.u32 2, %s25
        %p369 = scmp.lt.s32.totalorder %s24, 1
        %s370 = scalar_select %p369, %s24, 1
        %p371 = scmp.lt.s32.totalorder %s368, 1
        %s372 = scalar_select %p371, %s368, 1
        %s373 = smul.addr %s370, 2
        %s374 = sadd.s32 %s372, %s373
        %s375 = smul.addr %s374, 4
        %s376 = scalar_lea.vmem %s2, %s375
        %p377 = pneg %p111
        %p378 = pneg %p108
        %s379 = smul.u32 2, %s25
        %p380 = scmp.lt.s32.totalorder %s24, 1
        %s381 = scalar_select %p380, %s24, 1
        %p382 = scmp.lt.s32.totalorder %s379, 1
        %s383 = scalar_select %p382, %s379, 1
        %s384 = smul.addr %s381, 2
        %s385 = sadd.s32 %s383, %s384
        %s386 = smul.addr %s385, 4
        %s387 = scalar_lea.vmem %s3, %s386
        %p388 = pneg %p139
        %p389 = pneg %p136
        %s390 = smul.u32 2, %s25
        %p391 = scmp.lt.s32.totalorder %s24, 1
        %s392 = scalar_select %p391, %s24, 1
        %p393 = scmp.lt.s32.totalorder %s390, 1
        %s394 = scalar_select %p393, %s390, 1
        %s395 = smul.addr %s392, 2
        %s396 = sadd.s32 %s394, %s395
        %s397 = scalar_lea.vmem %s4, %s396
        %p398 = pneg %p167
        %p399 = pneg %p164
        %p400 = pneg %p188
        %p401 = pneg %p185
        %p402 = pneg %p214
        %p403 = pneg %p211
        %p404 = scmp.lt.s32.totalorder %s24, 1
        %s405 = scalar_select %p404, %s24, 1
        %s406 = smul.addr %s405, 8
        %s407 = scalar_lea.vmem %s6, %s406
        %p408 = pneg %p240
        %p409 = pneg %p237
        %p410 = scmp.lt.s32.totalorder %s24, 1
        %s411 = scalar_select %p410, %s24, 1
        %s412 = smul.addr %s411, 8
        %s413 = scalar_lea.vmem %s7, %s412
        %s414 = smul.u32 2, %s25
        %p415 = scmp.lt.s32.totalorder %s24, 1
        %s416 = scalar_select %p415, %s24, 1
        %p417 = scmp.lt.s32.totalorder %s414, 1
        %s418 = scalar_select %p417, %s414, 1
        %s419 = smul.addr %s416, 2
        %s420 = sadd.s32 %s418, %s419
        %s421 = smul.addr %s420, 4
        %s422 = scalar_lea.vmem %s0, %s421
        %s423 = smul.u32 2, %s25
        %s424 = smul.u32 2, %s25
        %p425 = scmp.lt.s32.totalorder %s24, 1
        %s426 = scalar_select %p425, %s24, 1
        %p427 = scmp.lt.s32.totalorder %s424, 1
        %s428 = scalar_select %p427, %s424, 1
        %s429 = smul.addr %s426, 2
        %s430 = sadd.s32 %s428, %s429
        %s431 = smul.addr %s430, 4
        %s432 = scalar_lea.vmem %s1, %s431
        %s433 = smul.u32 2, %s25
        %s434 = smul.u32 2, %s25
        %p435 = scmp.lt.s32.totalorder %s24, 1
        %s436 = scalar_select %p435, %s24, 1
        %p437 = scmp.lt.s32.totalorder %s434, 1
        %s438 = scalar_select %p437, %s434, 1
        %s439 = smul.addr %s436, 2
        %s440 = sadd.s32 %s438, %s439
        %s441 = smul.addr %s440, 4
        %s442 = scalar_lea.vmem %s2, %s441
        %s443 = smul.u32 2, %s25
        %s444 = smul.u32 2, %s25
        %p445 = scmp.lt.s32.totalorder %s24, 1
        %s446 = scalar_select %p445, %s24, 1
        %p447 = scmp.lt.s32.totalorder %s444, 1
        %s448 = scalar_select %p447, %s444, 1
        %s449 = smul.addr %s446, 2
        %s450 = sadd.s32 %s448, %s449
        %s451 = smul.addr %s450, 4
        %s452 = scalar_lea.vmem %s3, %s451
        %s453 = smul.u32 2, %s25
        %s454 = smul.u32 2, %s25
        %p455 = scmp.lt.s32.totalorder %s24, 1
        %s456 = scalar_select %p455, %s24, 1
        %p457 = scmp.lt.s32.totalorder %s454, 1
        %s458 = scalar_select %p457, %s454, 1
        %s459 = smul.addr %s456, 2
        %s460 = sadd.s32 %s458, %s459
        %s461 = scalar_lea.vmem %s4, %s460
        %s462 = smul.u32 2, %s25
        %p463 = scmp.lt.s32.totalorder %s24, 1
        %s464 = scalar_select %p463, %s24, 1
        %s465 = smul.addr %s464, 8
        %s466 = scalar_lea.vmem %s6, %s465
        %p467 = scmp.lt.s32.totalorder %s24, 1
        %s468 = scalar_select %p467, %s24, 1
        %s469 = smul.addr %s468, 8
        %s470 = scalar_lea.vmem %s7, %s469
        %v471 = vld [vmem:[%s422] sm:$0x77]
        %v472 = vld [vmem:[%s432] sm:$0x77]
        %v473 = vld [vmem:[%s442] sm:$0x77]
        %v474 = vsub.f32 %v472, %v473
        %v475 = vld [vmem:[%s452] sm:$0x77]
        %v476 = vld [vmem:[%s461] sm:$0x3]
        %s477 = smul.u32 %s24, 128
        %s478 = sld [smem:[#allocation3 + %s477]]
        %v479 = vstv %s478
        %v480 = vmul.f32 %v475, %v479
        %s481 = sadd.s32 %s477, 3
        %s482 = sld [smem:[#allocation3 + %s481]]
        %v483 = vstv %s482
        %v484 = vmul.f32 %v475, %v483
        %v486 = vrot.slane %v484, 5
        %v487 = vrot.slane %v486, 4
        %v489 = vadd.f32 %v480, %v487
        %s490 = sadd.s32 %s477, 6
        %s491 = sld [smem:[#allocation3 + %s490]]
        %v492 = vstv %s491
        %v493 = vmul.f32 %v475, %v492
        %v495 = vrot.slane %v493, 6
        %v496 = vrot.slane %v495, 4
        %v498 = vadd.f32 %v489, %v496
        %s499 = sadd.s32 %s477, 1
        %s500 = sld [smem:[#allocation3 + %s499]]
        %v501 = vstv %s500
        %v502 = vmul.f32 %v475, %v501
        %s503 = sadd.s32 %s477, 4
        %s504 = sld [smem:[#allocation3 + %s503]]
        %v505 = vstv %s504
        %v506 = vmul.f32 %v475, %v505
        %v508 = vrot.slane %v506, 5
        %v509 = vrot.slane %v508, 4
        %v511 = vadd.f32 %v502, %v509
        %s512 = sadd.s32 %s477, 7
        %s513 = sld [smem:[#allocation3 + %s512]]
        %v514 = vstv %s513
        %v515 = vmul.f32 %v475, %v514
        %v517 = vrot.slane %v515, 6
        %v518 = vrot.slane %v517, 4
        %v520 = vadd.f32 %v511, %v518
        %s521 = sadd.s32 %s477, 2
        %s522 = sld [smem:[#allocation3 + %s521]]
        %v523 = vstv %s522
        %v524 = vmul.f32 %v475, %v523
        %s525 = sadd.s32 %s477, 5
        %s526 = sld [smem:[#allocation3 + %s525]]
        %v527 = vstv %s526
        %v528 = vmul.f32 %v475, %v527
        %v530 = vrot.slane %v528, 5
        %v531 = vrot.slane %v530, 4
        %v533 = vadd.f32 %v524, %v531
        %s534 = sadd.s32 %s477, 8
        %s535 = sld [smem:[#allocation3 + %s534]]
        %v536 = vstv %s535
        %v537 = vmul.f32 %v475, %v536
        %v539 = vrot.slane %v537, 6
        %v540 = vrot.slane %v539, 4
        %v542 = vadd.f32 %v533, %v540
        %v543 = vmul.f32 %v475, %v474
        %v545 = vrot.slane %v543, 5
        %v546 = vrot.slane %v545, 4
        %v548 = vadd.f32 %v543, %v546
        %v549 = vrot.slane %v543, 6
        %v550 = vrot.slane %v549, 4
        %v552 = vadd.f32 %v548, %v550
        %v553 = vmul.f32 %v474, %v474
        %v555 = vrot.slane %v553, 5
        %v556 = vrot.slane %v555, 4
        %v558 = vadd.f32 %v553, %v556
        %v559 = vrot.slane %v553, 6
        %v560 = vrot.slane %v559, 4
        %v562 = vadd.f32 %v558, %v560
        %vm563 = vcmp.lt.f32.partialorder %v476, 0.5
        %vm564 = vcmp.gt.f32.partialorder %v562, 0.01
        %v565 = vsel %vm564, 1, 0
        %v567 = vunpack.c.l.s4 1966171168
        %v568 = vunpack.c.0.s8 %v567
        %v569 = vlaneseq
        %v570 = vshrl.u32 %v569, 7
        %v571 = vsub.s32 %v568, %v570
        %v572 = vrot.slane %v565, %v571
        %v574 = vunpack.c.l.s4 1966171168
        %v575 = vunpack.c.0.s8 %v574
        %v576 = vlaneseq
        %v577 = vshrl.u32 %v576, 7
        %v578 = vsub.s32 %v575, %v577
        %v579 = vrot.slane %v572, %v578
        %vm580 = vcmp.ne.s32.totalorder %v579, 0
        %vm581 = vmor %vm563, %vm580
        %v582 = vmul.f32 %v471, 0.010476191
        %v583 = vmul.f32 %v471, %v471
        %v584 = vmul.f32 %v583, 0.0006349206
        %v585 = vmul.f32 %v498, %v498
        %v586 = vmul.f32 %v520, %v520
        %v587 = vadd.f32 %v585, %v586
        %v588 = vmul.f32 %v582, %v582
        %v590 = vrot.slane %v588, 6
        %v591 = vrot.slane %v590, 4
        %v593 = vmul.f32 %v587, %v591
        %v594 = vmul.f32 %v542, %v542
        %v595 = vmul.f32 %v584, %v584
        %v597 = vrot.slane %v595, 6
        %v598 = vrot.slane %v597, 4
        %v600 = vmul.f32 %v594, %v598
        %v601 = vadd.f32 %v593, %v600
        %v602 = vadd.f32 %v601, 1e-08
        %v603 = vrsqrt.pop %v602
        %v604 = vmul.f32 %v552, %v603
        %v607 = vunpack.c.l.s4 1966171168
        %v608 = vunpack.c.0.s8 %v607
        %v609 = vlaneseq
        %v610 = vshrl.u32 %v609, 7
        %v611 = vsub.s32 %v608, %v610
        %v612 = vrot.slane %v604, %v611
        %v614 = vunpack.c.l.s4 1966171168
        %v615 = vunpack.c.0.s8 %v614
        %v616 = vlaneseq
        %v617 = vshrl.u32 %v616, 7
        %v618 = vsub.s32 %v615, %v617
        %v619 = vrot.slane %v612, %v618
        %v621 = vsel %vm581, 1e-06, %v619
        %v622 = vsub.f32 0.0, %v603
        %v624 = vrot.slane %v471, 6
        %v625 = vrot.slane %v624, 4
        %v627 = vmul.f32 %v520, %v625
        %v628 = vrot.slane %v471, 5
        %v629 = vrot.slane %v628, 4
        %v631 = vmul.f32 %v542, %v629
        %v632 = vsub.f32 %v627, %v631
        %v633 = vmul.f32 %v632, %v622
        %v636 = vunpack.c.l.s4 1966171168
        %v637 = vunpack.c.0.s8 %v636
        %v638 = vlaneseq
        %v639 = vshrl.u32 %v638, 7
        %v640 = vsub.s32 %v637, %v639
        %v641 = vrot.slane %v633, %v640
        %v643 = vunpack.c.l.s4 1966171168
        %v644 = vunpack.c.0.s8 %v643
        %v645 = vlaneseq
        %v646 = vshrl.u32 %v645, 7
        %v647 = vsub.s32 %v644, %v646
        %v648 = vrot.slane %v641, %v647
        %v650 = vlaneseq
        %vm651 = vcmp.ge.s32.totalorder %v650, 0
        %vm652 = vcmp.lt.s32.totalorder %v650, 256
        %vm653 = vmand %vm651, %vm652
        %654 = vst.msk [vmem:[#allocation2] ss:$8 sm:$0x3] %vm653, %v648
        %655 = vst.msk [vmem:[#allocation2] ss:$8 sm:$0x0] %vm653, %v648
        %v656 = vmul.f32 %v542, %v471
        %v657 = vmul.f32 %v498, %v625
        %v658 = vsub.f32 %v656, %v657
        %v659 = vmul.f32 %v658, %v622
        %v662 = vunpack.c.l.s4 1966171168
        %v663 = vunpack.c.0.s8 %v662
        %v664 = vlaneseq
        %v665 = vshrl.u32 %v664, 7
        %v666 = vsub.s32 %v663, %v665
        %v667 = vrot.slane %v659, %v666
        %v669 = vunpack.c.l.s4 1966171168
        %v670 = vunpack.c.0.s8 %v669
        %v671 = vlaneseq
        %v672 = vshrl.u32 %v671, 7
        %v673 = vsub.s32 %v670, %v672
        %v674 = vrot.slane %v667, %v673
        %s676 = scalar_lea.vmem [#allocation2], 1
        %677 = vst.msk [vmem:[%s676] ss:$8 sm:$0x3] %vm653, %v674
        %678 = vst.msk [vmem:[%s676] ss:$8 sm:$0x0] %vm653, %v674
        %v679 = vmul.f32 %v498, %v629
        %v680 = vmul.f32 %v520, %v471
        %v681 = vsub.f32 %v679, %v680
        %v682 = vmul.f32 %v681, %v622
        %v685 = vunpack.c.l.s4 1966171168
        %v686 = vunpack.c.0.s8 %v685
        %v687 = vlaneseq
        %v688 = vshrl.u32 %v687, 7
        %v689 = vsub.s32 %v686, %v688
        %v690 = vrot.slane %v682, %v689
        %v692 = vunpack.c.l.s4 1966171168
        %v693 = vunpack.c.0.s8 %v692
        %v694 = vlaneseq
        %v695 = vshrl.u32 %v694, 7
        %v696 = vsub.s32 %v693, %v695
        %v697 = vrot.slane %v690, %v696
        %s699 = scalar_lea.vmem [#allocation2], 2
        %700 = vst.msk [vmem:[%s699] ss:$8 sm:$0x3] %vm653, %v697
        %701 = vst.msk [vmem:[%s699] ss:$8 sm:$0x0] %vm653, %v697
        %v702 = vmul.f32 %v498, %v603
        %v705 = vunpack.c.l.s4 1966171168
        %v706 = vunpack.c.0.s8 %v705
        %v707 = vlaneseq
        %v708 = vshrl.u32 %v707, 7
        %v709 = vsub.s32 %v706, %v708
        %v710 = vrot.slane %v702, %v709
        %v712 = vunpack.c.l.s4 1966171168
        %v713 = vunpack.c.0.s8 %v712
        %v714 = vlaneseq
        %v715 = vshrl.u32 %v714, 7
        %v716 = vsub.s32 %v713, %v715
        %v717 = vrot.slane %v710, %v716
        %s719 = scalar_lea.vmem [#allocation2], 3
        %720 = vst.msk [vmem:[%s719] ss:$8 sm:$0x3] %vm653, %v717
        %721 = vst.msk [vmem:[%s719] ss:$8 sm:$0x0] %vm653, %v717
        %v722 = vmul.f32 %v520, %v603
        %v725 = vunpack.c.l.s4 1966171168
        %v726 = vunpack.c.0.s8 %v725
        %v727 = vlaneseq
        %v728 = vshrl.u32 %v727, 7
        %v729 = vsub.s32 %v726, %v728
        %v730 = vrot.slane %v722, %v729
        %v732 = vunpack.c.l.s4 1966171168
        %v733 = vunpack.c.0.s8 %v732
        %v734 = vlaneseq
        %v735 = vshrl.u32 %v734, 7
        %v736 = vsub.s32 %v733, %v735
        %v737 = vrot.slane %v730, %v736
        %s739 = scalar_lea.vmem [#allocation2], 4
        %740 = vst.msk [vmem:[%s739] ss:$8 sm:$0x3] %vm653, %v737
        %741 = vst.msk [vmem:[%s739] ss:$8 sm:$0x0] %vm653, %v737
        %v742 = vmul.f32 %v542, %v603
        %v745 = vunpack.c.l.s4 1966171168
        %v746 = vunpack.c.0.s8 %v745
        %v747 = vlaneseq
        %v748 = vshrl.u32 %v747, 7
        %v749 = vsub.s32 %v746, %v748
        %v750 = vrot.slane %v742, %v749
        %v752 = vunpack.c.l.s4 1966171168
        %v753 = vunpack.c.0.s8 %v752
        %v754 = vlaneseq
        %v755 = vshrl.u32 %v754, 7
        %v756 = vsub.s32 %v753, %v755
        %v757 = vrot.slane %v750, %v756
        %s759 = scalar_lea.vmem [#allocation2], 5
        %760 = vst.msk [vmem:[%s759] ss:$8 sm:$0x3] %vm653, %v757
        %761 = vst.msk [vmem:[%s759] ss:$8 sm:$0x0] %vm653, %v757
        %v762 = vld [vmem:[#allocation2] sm:$0x3f]
        %v763 = vld [vmem:[#allocation2 + $0x8] sm:$0x3f]
        %764 = vmatprep.subr.mxu0 %v763
        %765 = vmatpush1.xpose.msra.mxu0 %v762
        %766 = vmatprep.subr.mxu0 0.0
        %767 = vmatpush1.xpose.msra.mxu0 0.0
        %768 = vmatprep.subr.mxu0 0.0
        %769 = vmatpush1.xpose.msra.mxu0 0.0
        %770 = vmatprep.subr.mxu0 0.0
        %771 = vmatpush1.xpose.msra.mxu0 0.0
        %772 = vmatprep.subr.mxu0 0.0
        %773 = vmatpush1.xpose.msra.mxu0 0.0
        %774 = vmatprep.subr.mxu0 0.0
        %775 = vmatpush1.xpose.msra.mxu0 0.0
        %776 = vmatprep.subr.mxu0 0.0
        %777 = vmatpush1.xpose.msra.mxu0 0.0
        %778 = vmatprep.subr.mxu0 0.0
        %779 = vmatpush1.xpose.msra.mxu0 0.0
        %780 = vmatprep.subr.mxu0 0.0
        %781 = vmatpush1.xpose.msra.mxu0 0.0
        %782 = vmatprep.subr.mxu0 0.0
        %783 = vmatpush1.xpose.msra.mxu0 0.0
        %784 = vmatprep.subr.mxu0 0.0
        %785 = vmatpush1.xpose.msra.mxu0 0.0
        %786 = vmatprep.subr.mxu0 0.0
        %787 = vmatpush1.xpose.msra.mxu0 0.0
        %788 = vmatprep.subr.mxu0 0.0
        %789 = vmatpush1.xpose.msra.mxu0 0.0
        %790 = vmatprep.subr.mxu0 0.0
        %791 = vmatpush1.xpose.msra.mxu0 0.0
        %792 = vmatprep.subr.mxu0 0.0
        %793 = vmatpush1.xpose.msra.mxu0 0.0
        %794 = vmatprep.subr.mxu0 0.0
        %795 = vmatpush1.xpose.msra.mxu0 0.0
        %796 = vmatprep.subr.mxu0 0.0
        %797 = vmatpush1.xpose.msra.mxu0 0.0
        %798 = vmatprep.subr.mxu0 0.0
        %799 = vmatpush1.xpose.msra.mxu0 0.0
        %800 = vmatprep.subr.mxu0 0.0
        %801 = vmatpush1.xpose.msra.mxu0 0.0
        %802 = vmatprep.subr.mxu0 0.0
        %803 = vmatpush1.xpose.msra.mxu0 0.0
        %804 = vmatprep.subr.mxu0 0.0
        %805 = vmatpush1.xpose.msra.mxu0 0.0
        %806 = vmatprep.subr.mxu0 0.0
        %807 = vmatpush1.xpose.msra.mxu0 0.0
        %808 = vmatprep.subr.mxu0 0.0
        %809 = vmatpush1.xpose.msra.mxu0 0.0
        %810 = vmatprep.subr.mxu0 0.0
        %811 = vmatpush1.xpose.msra.mxu0 0.0
        %812 = vmatprep.subr.mxu0 0.0
        %813 = vmatpush1.xpose.msra.mxu0 0.0
        %814 = vmatprep.subr.mxu0 0.0
        %815 = vmatpush1.xpose.msra.mxu0 0.0
        %816 = vmatprep.subr.mxu0 0.0
        %817 = vmatpush1.xpose.msra.mxu0 0.0
        %818 = vmatprep.subr.mxu0 0.0
        %819 = vmatpush1.xpose.msra.mxu0 0.0
        %820 = vmatprep.subr.mxu0 0.0
        %821 = vmatpush1.xpose.msra.mxu0 0.0
        %822 = vmatprep.subr.mxu0 0.0
        %823 = vmatpush1.xpose.msra.mxu0 0.0
        %824 = vmatprep.subr.mxu0 0.0
        %825 = vmatpush1.xpose.msra.mxu0 0.0
        %826 = vmatprep.subr.mxu0 0.0
        %827 = vmatpush1.xpose.msra.mxu0 0.0
        %828 = vmatprep.mubr.f32.mxu0 %v763
        %829 = vmatmul.mubr.f32.gmra.mrb[0].mxu0 %v762
        %v830 = vpop.f32.mrb[0].mxu0
        %v831 = vadd.f32 0.0, %v830
        %v832 = vpop.f32.mrb[0].mxu0
        %833 = vdwg.mxu0
        %v835 = vlaneseq
        %v836 = vshrl.u32 %v835, 7
        %v837 = vsub.s32 0, %v836
        %v838 = vrot.slane %v621, %v837
        %v839 = vlaneseq
        %v840 = vshrl.u32 %v839, 7
        %v841 = vsub.s32 1, %v840
        %v842 = vrot.slane %v621, %v841
        %v845 = vmul.f32 %v762, %v838
        %v846 = vmul.f32 %v763, %v842
        %vm847 = vcmask 1045504
        %v848 = vsel %vm847, %v845, 0.0
        %v849 = vsel %vm847, %v846, 0.0
        %v850 = vadd.f32 %v848, %v849
        %851 = vadd.xlane.f32.xlu0 %v850
        %v852 = vpop.xlane.xlu0 %851
        %p853 = scmp.eq.s32.totalorder %s25, 0
        // Predicated region
        $region49: #{inverse_icp_forward.5} parent=43 // pred_check
          %p854 = pneg %p853
        $region50: #{inverse_icp_forward.5} parent=43 // pred_check_branch
          %856 = sbr.rel (%p854) target = $region52
        $region51: #{inverse_icp_forward.5} parent=43 // pred_region
          %vm857 = vcmask 46080
          %858 = vst.msk [vmem:[%s466] sm:$0x3f] %vm857, 0.0
          %vm859 = vcmask 5120
          %860 = vst.msk [vmem:[%s470] sm:$0x3f] %vm859, 0.0
        $region52: #{inverse_icp_forward.5} parent=43 // pred_fallthru
          _
        %v861 = vld [vmem:[%s466] sm:$0x3f]
        %v862 = vadd.f32 %v861, %v831
        %vm863 = vcmask 46080
        %864 = vst.msk [vmem:[%s466] sm:$0x3f] %vm863, %v862
        %v865 = vld [vmem:[%s470] sm:$0x3f]
        %v866 = vadd.f32 %v865, %v852
        %vm867 = vcmask 5120
        %868 = vst.msk [vmem:[%s470] sm:$0x3f] %vm867, %v866
        %p869 = scmp.lt.s32.totalorder %s24, 1
        %s870 = scalar_select %p869, %s24, 1
        %s871 = smul.addr %s870, 8
        %s872 = scalar_lea.vmem %s6, %s871
        %p873 = scmp.lt.s32.totalorder %s24, 1
        %s874 = scalar_select %p873, %s24, 1
        %s875 = smul.addr %s874, 8
        %s876 = scalar_lea.vmem %s7, %s875
        // Predicated region
        $region53: #{inverse_icp_forward.5} parent=43 // pred_check
          %p877 = pneg %p211
        $region54: #{inverse_icp_forward.5} parent=43 // pred_check_branch
          %879 = sbr.rel (%p877) target = $region56
        $region55: #{inverse_icp_forward.5} parent=43 // pred_region
          _
        $region56: #{inverse_icp_forward.5} parent=43 // pred_fallthru
          _
        // Predicated region
        $region57: #{inverse_icp_forward.5} parent=43 // pred_check
          %p880 = pneg %p237
        $region58: #{inverse_icp_forward.5} parent=43 // pred_check_branch
          %882 = sbr.rel (%p880) target = $region60
        $region59: #{inverse_icp_forward.5} parent=43 // pred_region
          _
        $region60: #{inverse_icp_forward.5} parent=43 // pred_fallthru
          _
      $region44: #{inverse_icp_forward.5} parent=5 // pred_fallthru
        _
      %p883 = scmp.le.s32.totalorder 2, %s15
      // Predicated region
      $region61: #{inverse_icp_forward.5} parent=5 // pred_check
        %p884 = pneg %p883
      $region62: #{inverse_icp_forward.5} parent=5 // pred_check_branch
        %886 = sbr.rel (%p884) target = $region64
      $region63: #{inverse_icp_forward.5} parent=5 // pred_region
        %s887 = ssub.s32 %s15, 2
        // Predicated region
        $region65: #{inverse_icp_forward.5} parent=63 // pred_check
          %p888 = pneg %p217
        $region66: #{inverse_icp_forward.5} parent=63 // pred_check_branch
          %890 = sbr.rel (%p888) target = $region68
        $region67: #{inverse_icp_forward.5} parent=63 // pred_region
          %p891 = scmp.lt.s32.totalorder %s26, 1
          %s892 = scalar_select %p891, %s26, 1
          %s893 = smul.addr %s892, 8
          %s894 = scalar_lea.vmem %s6, %s893
        $region68: #{inverse_icp_forward.5} parent=63 // pred_fallthru
          _
        // Predicated region
        $region69: #{inverse_icp_forward.5} parent=63 // pred_check
          %p895 = pneg %p243
        $region70: #{inverse_icp_forward.5} parent=63 // pred_check_branch
          %897 = sbr.rel (%p895) target = $region72
        $region71: #{inverse_icp_forward.5} parent=63 // pred_region
          %p898 = scmp.lt.s32.totalorder %s26, 1
          %s899 = scalar_select %p898, %s26, 1
          %s900 = smul.addr %s899, 8
          %s901 = scalar_lea.vmem %s7, %s900
        $region72: #{inverse_icp_forward.5} parent=63 // pred_fallthru
          _
      $region64: #{inverse_icp_forward.5} parent=5 // pred_fallthru
        _
    $region6: #{inverse_icp_forward.5} parent=1 // loop_footer
      %s19 = sadd.s32 1, %s15
    $region7: #{inverse_icp_forward.5} parent=1 // loop_footer_branch
      %14 = sbr.rel target = $region3
    $region8: #{inverse_icp_forward.5} parent=1 // loop_exit
      _
    %902 = vsyncpa [#allocation4], 1
    %s903 = scalar_lea.sflag [#allocation4], 1
    %904 = vsyncpa %s903, 1

</llo_original>
